<compile_context>
chip_gen: v7x
topology: tpu7x:2x2x1
jax: 0.10.0
libtpu: 0.0.40
codegen_flags: <defaults>
</compile_context>

<pallas_src>
import jax
import jax.numpy as jnp
from jax import lax
from jax.experimental import pallas as pl
from jax.experimental.pallas import tpu as pltpu

# RGB -> gray / YCbCr coefficients (exactly as in the PyTorch module)
_GRAY = (0.299, 0.587, 0.114)
_CB = (-0.168736, -0.331264, 0.5)
_CR = (0.5, -0.418688, -0.081312)

_SOBEL_X = ((-1.0, 0.0, 1.0), (-2.0, 0.0, 2.0), (-1.0, 0.0, 1.0))
_SOBEL_Y = ((-1.0, -2.0, -1.0), (0.0, 0.0, 0.0), (1.0, 2.0, 1.0))


def _loss_kernel(ir_ref, vis_ref, fus_ref, out_ref, carry_ref):
    """One (batch b, row-strip s) grid step.

    Kernel refs (batch dim squeezed):
      ir/vis/fus_ref : f32/bf16[3, TH, W]  RGB strip
      out_ref        : f32[8, W]  per-batch per-lane partial sums (rows 0..4 used)
                         0: sum |ir - fus|              (over 3*H*W)
                         1: sum |Cb_vis - Cb_fused|     (over H*W)
                         2: sum |Cr_vis - Cr_fused|     (over H*W)
                         3: sum (gfx - max(gvx, gix))^2 (over H*W)
                         4: sum (gfy - max(gvy, giy))^2 (over H*W)
      carry_ref      : f32[8, W]  last two gray rows of the previous strip
                                  (rows 0-1: vis, 2-3: ir, 4-5: fus)
    """
    s = pl.program_id(1)
    n_s = pl.num_programs(1)
    is_first = s == 0

    ir = ir_ref[...].astype(jnp.float32)     # (3, TH, W)
    vis = vis_ref[...].astype(jnp.float32)
    fus = fus_ref[...].astype(jnp.float32)
    TH, W = ir.shape[1], ir.shape[2]

    # Fast (XLU roll) path only for natively-tiled shapes; otherwise fall back
    # to the concatenate construction (correct, just slower).
    lane_roll_ok = (W % 128 == 0)
    sub_roll_ok = (TH % 8 == 0)
    if lane_roll_ok:
        col = lax.broadcasted_iota(jnp.int32, (TH, W), 1)
        col_first = col == 0
        col_last = col == W - 1
    if sub_roll_ok:
        row_first = lax.broadcasted_iota(jnp.int32, (TH, W), 0) == 0

    def h_left(v):    # value at column c taken from c-1, replicate at left edge
        if lane_roll_ok:
            return jnp.where(col_first, v, pltpu.roll(v, shift=1, axis=1))
        return jnp.concatenate([v[:, :1], v[:, : W - 1]], axis=1)

    def h_right(v):   # value at column c taken from c+1, replicate at right edge
        if lane_roll_ok:
            return jnp.where(col_last, v, pltpu.roll(v, shift=W - 1, axis=1))
        return jnp.concatenate([v[:, 1:], v[:, W - 1:]], axis=1)

    def grad_xy(vsm, vdf):
        # vsm: vertical [1,2,1] pass -> horizontal [-1,0,1] = |sobel_x|
        # vdf: vertical [-1,0,1] pass -> horizontal [1,2,1]  = |sobel_y|
        gx = jnp.abs(h_right(vsm) - h_left(vsm))
        gy = jnp.abs(h_left(vdf) + 2.0 * vdf + h_right(vdf))
        return gx, gy

    # ---------------- intensity: sum |ir - fus| over channels & rows ----------
    ad = jnp.abs(ir - fus)
    r_int = jnp.sum(ad[0] + ad[1] + ad[2], axis=0, keepdims=True)          # (1, W)

    # ---------------- color: Cb/Cr of the difference (vis - fus) --------------
    d = vis - fus
    cb_d = _CB[0] * d[0] + _CB[1] * d[1] + _CB[2] * d[2]
    cr_d = _CR[0] * d[0] + _CR[1] * d[1] + _CR[2] * d[2]
    r_cb = jnp.sum(jnp.abs(cb_d), axis=0, keepdims=True)
    r_cr = jnp.sum(jnp.abs(cr_d), axis=0, keepdims=True)

    # ---------------- texture: separable replicate-padded Sobel ---------------
    def gray(img):
        return _GRAY[0] * img[0] + _GRAY[1] * img[1] + _GRAY[2] * img[2]

    g_vis, g_ir, g_fus = gray(vis), gray(ir), gray(fus)   # (TH, W) each

    def vert_pass(g, cbase):
        # Output row j of this strip is image row (s*TH - 1 + j), j = 0..TH-1.
        # Its 3-row window is E[j], E[j+1], E[j+2] where E[k] = gray row s*TH-2+k:
        #   E[j+2] -> g[j]
        #   E[j+1] -> g[j-1]      (j==0: previous strip's last row  = prev1)
        #   E[j]   -> g[j-2]      (j==0: prev0, j==1: prev1)
        # At s == 0, prev0/prev1 replicate row 0 (prev0 only feeds the bogus
        # j == 0 row, whose contribution is corrected below).
        g0 = g[0:1, :]
        prev0 = jnp.where(is_first, g0, carry_ref[cbase:cbase + 1, :])
        prev1 = jnp.where(is_first, g0, carry_ref[cbase + 1:cbase + 2, :])
        if sub_roll_ok:
            e1 = jnp.where(row_first, prev1, pltpu.roll(g, shift=1, axis=0))
            e0 = jnp.where(row_first, prev0, pltpu.roll(e1, shift=1, axis=0))
        else:
            e1 = jnp.concatenate([prev1, g[: TH - 1, :]], axis=0)
            e0 = jnp.concatenate([prev0, prev1, g[: TH - 2, :]], axis=0)
        vsm = e0 + 2.0 * e1 + g      # column [1, 2, 1]
        vdf = g - e0                 # column [-1, 0, 1]
        return vsm, vdf

    gxv, gyv = grad_xy(*vert_pass(g_vis, 0))
    gxi, gyi = grad_xy(*vert_pass(g_ir, 2))
    gxf, gyf = grad_xy(*vert_pass(g_fus, 4))

    dx = gxf - jnp.maximum(gxv, gxi)
    dy = gyf - jnp.maximum(gyv, gyi)
    dx2 = dx * dx
    dy2 = dy * dy

    # Row j == 0 of the first strip maps to the nonexistent image row -1.  With
    # the replicated top carry its vdf row is exactly 0 (so dy2[0] == 0 at
    # s == 0 and needs no fix); subtract its dx^2 as a (1, W) correction instead
    # of masking the whole tile every step.
    r_dx = jnp.sum(dx2, axis=0, keepdims=True) - jnp.where(is_first, dx2[0:1, :], 0.0)
    r_dy = jnp.sum(dy2, axis=0, keepdims=True)

    # Single coalesced (8, W) accumulator update; s == 0 init folded in.
    upd = jnp.concatenate(
        [r_int, r_cb, r_cr, r_dx, r_dy, jnp.zeros((3, W), jnp.float32)], axis=0)
    out_ref[...] = jnp.where(is_first, upd, out_ref[...] + upd)

    # Bottom image row (H-1) needs replicate padding below; handled once at the
    # final strip (tiny (1, W) work, so the concat shift form is fine here).
    @pl.when(s == n_s - 1)
    def _last_row():
        def hl(v):
            return jnp.concatenate([v[:, :1], v[:, : W - 1]], axis=1)

        def hr(v):
            return jnp.concatenate([v[:, 1:], v[:, W - 1:]], axis=1)

        def last(g):
            vsm_l = g[TH - 2:TH - 1, :] + 3.0 * g[TH - 1:TH, :]
            vdf_l = g[TH - 1:TH, :] - g[TH - 2:TH - 1, :]
            gx = jnp.abs(hr(vsm_l) - hl(vsm_l))
            gy = jnp.abs(hl(vdf_l) + 2.0 * vdf_l + hr(vdf_l))
            return gx, gy

        lxv, lyv = last(g_vis)
        lxi, lyi = last(g_ir)
        lxf, lyf = last(g_fus)
        ldx = lxf - jnp.maximum(lxv, lxi)
        ldy = lyf - jnp.maximum(lyv, lyi)
        out_ref[3:5, :] += jnp.concatenate([ldx * ldx, ldy * ldy], axis=0)

    # Carry the last two gray rows of this strip into the next strip of the same
    # batch (never read at s == 0, so stale values across batches are harmless).
    carry_ref[...] = jnp.concatenate(
        [g_vis[TH - 2:, :], g_ir[TH - 2:, :], g_fus[TH - 2:, :],
         jnp.zeros((2, W), jnp.float32)], axis=0)


def _vmem_capacity_bytes():
    """Physical VMEM of this TPU generation; conservative v7x fallback."""
    try:
        return int(pltpu.get_tpu_info().vmem_capacity_bytes)
    except Exception:
        return 64 * 1024 * 1024


def _pick_tile_rows(H, W, vmem_cap, *, max_rows=1024):
    """Largest multiple-of-8 row count dividing H whose working set fits ~half of
    VMEM.  Per step: 3 inputs x 2 pipeline buffers x (3, TH, W) f32 blocks plus
    roughly 20 live (TH, W) f32 intermediates -> ~152 * TH * W bytes."""
    max_strip_elems = max(8 * max(W, 1), (vmem_cap // 2) // 152)
    cap = max(8, min(max_rows, max_strip_elems // max(W, 1)))
    best = 0
    th = 8
    while th <= min(H, cap):
        if H % th == 0:
            best = th
        th += 8
    # TODO(synk): for H with no multiple-of-8 divisor, add a masked remainder
    # strip instead of the full-height fallback (VMEM-heavy for huge images).
    return best if best > 0 else H


def fusion_bias_ir_loss(image_infrared, image_visible, image_fused, *, tile_rows=None):
    B, C, H, W = image_infrared.shape
    assert C == 3, "kernel expects 3-channel NCHW inputs"
    assert H >= 4 and W >= 2, "degenerate image sizes not supported"

    vmem_cap = _vmem_capacity_bytes()
    TH = tile_rows if tile_rows is not None else _pick_tile_rows(H, W, vmem_cap)
    assert H % TH == 0 and (TH % 8 == 0 or TH == H) and TH >= 4
    S = H // TH

    strip_bytes = TH * W * 4
    est = (3 * 2 * 3 + 20) * strip_bytes
    vmem_limit = int(min(0.9 * vmem_cap, max(32 * 1024 * 1024, 2 * est)))

    img_spec = pl.BlockSpec((pl.Squeezed(), 3, TH, W), lambda b, s: (b, 0, s, 0))
    partial = pl.pallas_call(
        _loss_kernel,
        out_shape=jax.ShapeDtypeStruct((B, 8, W), jnp.float32),
        grid=(B, S),
        in_specs=[img_spec, img_spec, img_spec],
        out_specs=pl.BlockSpec((pl.Squeezed(), 8, W), lambda b, s: (b, 0, 0)),
        scratch_shapes=[pltpu.VMEM((8, W), jnp.float32)],
        compiler_params=pltpu.CompilerParams(
            dimension_semantics=("parallel", "arbitrary"),
            vmem_limit_bytes=vmem_limit,
        ),
    )(image_infrared, image_visible, image_fused)

    # Stage-2 reduction + loss weighting (tiny, in plain JAX).
    tot = jnp.sum(partial, axis=(0, 2))                # (8,)
    n_pix = jnp.float32(B * H * W)
    loss_int = tot[0] / (3.0 * n_pix)                  # F.l1_loss (mean over B*3*H*W)
    loss_color = (tot[1] + tot[2]) / n_pix             # L1(cb) + L1(cr)
    loss_text = (tot[3] + tot[4]) / n_pix              # MSE_x + MSE_y
    return 10.0 * loss_int + 12.0 * loss_color + 5.0 * loss_text


def _reference(ir, vis, fus):
    """Pure-JAX reference of the PyTorch forward for verification."""
    def gray(x):
        return 0.299 * x[:, 0] + 0.587 * x[:, 1] + 0.114 * x[:, 2]

    def cbcr(x):
        r, g, b = x[:, 0], x[:, 1], x[:, 2]
        cb = -0.168736 * r - 0.331264 * g + 0.5 * b
        cr = 0.5 * r - 0.418688 * g - 0.081312 * b
        return cb, cr

    sx = jnp.array(_SOBEL_X, jnp.float32)
    sy = jnp.array(_SOBEL_Y, jnp.float32)

    def sobel(g):
        H, W = g.shape[1], g.shape[2]
        gp = jnp.pad(g, ((0, 0), (1, 1), (1, 1)), mode="edge")
        gx = sum(sx[i, j] * gp[:, i:i + H, j:j + W]
                 for i in range(3) for j in range(3))
        gy = sum(sy[i, j] * gp[:, i:i + H, j:j + W]
                 for i in range(3) for j in range(3))
        return jnp.abs(gx), jnp.abs(gy)

    loss_int = jnp.mean(jnp.abs(ir - fus))
    cbv, crv = cbcr(vis)
    cbf, crf = cbcr(fus)
    loss_color = jnp.mean(jnp.abs(cbv - cbf)) + jnp.mean(jnp.abs(crv - crf))
    gax, gay = sobel(gray(vis))
    gbx, gby = sobel(gray(ir))
    gfx, gfy = sobel(gray(fus))
    loss_text = (jnp.mean((gfx - jnp.maximum(gax, gbx)) ** 2)
                 + jnp.mean((gfy - jnp.maximum(gay, gby)) ** 2))
    return 10.0 * loss_int + 12.0 * loss_color + 5.0 * loss_text


if __name__ == "__main__":
    key = jax.random.PRNGKey(0)
    k1, k2, k3 = jax.random.split(key, 3)
    B, C, H, W = 2, 3, 16, 128
    image_infrared = jax.random.uniform(k1, (B, C, H, W), jnp.float32)
    image_visible = jax.random.uniform(k2, (B, C, H, W), jnp.float32)
    image_fused = jax.random.uniform(k3, (B, C, H, W), jnp.float32)

    # Default tiling (single strip at this size).
    out = fusion_bias_ir_loss(image_infrared, image_visible, image_fused)
    out = jax.block_until_ready(out)
    # Forced multi-strip tiling to exercise the cross-strip gray-row carry path.
    out_strips = fusion_bias_ir_loss(image_infrared, image_visible, image_fused,
                                     tile_rows=8)
    out_strips = jax.block_until_ready(out_strips)

    ref = _reference(image_infrared, image_visible, image_fused)
    assert jnp.isfinite(out), out
    assert jnp.allclose(out, ref, rtol=1e-4, atol=1e-5), (out, ref)
    assert jnp.allclose(out_strips, ref, rtol=1e-4, atol=1e-5), (out_strips, ref)

    print("KERNEL_OK")
</pallas_src>

<mosaic_0001>
module attributes {stable_mosaic.version = 11 : i64} {
  func.func @_loss_kernel(%arg0: i32, %arg1: i32, %arg2: memref<1x3x16x128xf32, #tpu.memory_space<vmem>>, %arg3: memref<1x3x16x128xf32, #tpu.memory_space<vmem>>, %arg4: memref<1x3x16x128xf32, #tpu.memory_space<vmem>>, %arg5: memref<1x8x128xf32, #tpu.memory_space<vmem>>, %arg6: memref<8x128xf32, #tpu.memory_space<vmem>>) attributes {dimension_semantics = [#tpu.dimension_semantics<parallel>, #tpu.dimension_semantics<arbitrary>], iteration_bounds = array<i64: 2, 1>, scalar_prefetch = 0 : i64, scratch_operands = 1 : i64, tpu.core_type = #tpu.core_type<tc>, window_params = [{transform_indices = @transform_0, window_bounds = array<i64: 1, 3, 16, 128>}, {transform_indices = @transform_1, window_bounds = array<i64: 1, 3, 16, 128>}, {transform_indices = @transform_2, window_bounds = array<i64: 1, 3, 16, 128>}, {transform_indices = @transform_3, window_bounds = array<i64: 1, 8, 128>}]} {
    %c0_i32 = arith.constant 0 : i32
    %0 = arith.cmpi eq, %arg1, %c0_i32 : i32
    %c0 = arith.constant 0 : index
    %c0_0 = arith.constant 0 : index
    %c0_1 = arith.constant 0 : index
    %c0_2 = arith.constant 0 : index
    %1 = vector.load %arg2[%c0, %c0_0, %c0_1, %c0_2] : memref<1x3x16x128xf32, #tpu.memory_space<vmem>>, vector<1x3x16x128xf32>
    %2 = vector.shape_cast %1 : vector<1x3x16x128xf32> to vector<3x16x128xf32>
    %c0_3 = arith.constant 0 : index
    %c0_4 = arith.constant 0 : index
    %c0_5 = arith.constant 0 : index
    %c0_6 = arith.constant 0 : index
    %3 = vector.load %arg3[%c0_3, %c0_4, %c0_5, %c0_6] : memref<1x3x16x128xf32, #tpu.memory_space<vmem>>, vector<1x3x16x128xf32>
    %4 = vector.shape_cast %3 : vector<1x3x16x128xf32> to vector<3x16x128xf32>
    %c0_7 = arith.constant 0 : index
    %c0_8 = arith.constant 0 : index
    %c0_9 = arith.constant 0 : index
    %c0_10 = arith.constant 0 : index
    %5 = vector.load %arg4[%c0_7, %c0_8, %c0_9, %c0_10] : memref<1x3x16x128xf32, #tpu.memory_space<vmem>>, vector<1x3x16x128xf32>
    %6 = vector.shape_cast %5 : vector<1x3x16x128xf32> to vector<3x16x128xf32>
    %7 = tpu.iota {dimensions = array<i32: 1>} : vector<16x128xi32>
    %c0_i32_11 = arith.constant 0 : i32
    %8 = vector.broadcast %c0_i32_11 : i32 to vector<16x128xi32>
    %9 = arith.cmpi eq, %7, %8 : vector<16x128xi32>
    %c127_i32 = arith.constant 127 : i32
    %10 = vector.broadcast %c127_i32 : i32 to vector<16x128xi32>
    %11 = arith.cmpi eq, %7, %10 : vector<16x128xi32>
    %12 = tpu.iota {dimensions = array<i32: 0>} : vector<16x128xi32>
    %c0_i32_12 = arith.constant 0 : i32
    %13 = vector.broadcast %c0_i32_12 : i32 to vector<16x128xi32>
    %14 = arith.cmpi eq, %12, %13 : vector<16x128xi32>
    %15 = arith.subf %2, %6 : vector<3x16x128xf32>
    %16 = math.absf %15 : vector<3x16x128xf32>
    %17 = vector.extract_strided_slice %16 {offsets = [0, 0, 0], sizes = [1, 16, 128], strides = [1, 1, 1]} : vector<3x16x128xf32> to vector<1x16x128xf32>
    %18 = vector.shape_cast %17 : vector<1x16x128xf32> to vector<16x128xf32>
    %19 = vector.extract_strided_slice %16 {offsets = [1, 0, 0], sizes = [1, 16, 128], strides = [1, 1, 1]} : vector<3x16x128xf32> to vector<1x16x128xf32>
    %20 = vector.shape_cast %19 : vector<1x16x128xf32> to vector<16x128xf32>
    %21 = arith.addf %18, %20 : vector<16x128xf32>
    %22 = vector.extract_strided_slice %16 {offsets = [2, 0, 0], sizes = [1, 16, 128], strides = [1, 1, 1]} : vector<3x16x128xf32> to vector<1x16x128xf32>
    %23 = vector.shape_cast %22 : vector<1x16x128xf32> to vector<16x128xf32>
    %24 = arith.addf %21, %23 : vector<16x128xf32>
    %cst = arith.constant dense<0.000000e+00> : vector<128xf32>
    %25 = vector.multi_reduction <add>, %24, %cst [0] : vector<16x128xf32> to vector<128xf32>
    %26 = vector.shape_cast %25 : vector<128xf32> to vector<1x128xf32>
    %27 = arith.subf %4, %6 : vector<3x16x128xf32>
    %28 = vector.extract_strided_slice %27 {offsets = [0, 0, 0], sizes = [1, 16, 128], strides = [1, 1, 1]} : vector<3x16x128xf32> to vector<1x16x128xf32>
    %29 = vector.shape_cast %28 : vector<1x16x128xf32> to vector<16x128xf32>
    %cst_13 = arith.constant -1.687360e-01 : f32
    %30 = vector.broadcast %cst_13 : f32 to vector<16x128xf32>
    %31 = arith.mulf %30, %29 : vector<16x128xf32>
    %32 = vector.extract_strided_slice %27 {offsets = [1, 0, 0], sizes = [1, 16, 128], strides = [1, 1, 1]} : vector<3x16x128xf32> to vector<1x16x128xf32>
    %33 = vector.shape_cast %32 : vector<1x16x128xf32> to vector<16x128xf32>
    %cst_14 = arith.constant -3.312640e-01 : f32
    %34 = vector.broadcast %cst_14 : f32 to vector<16x128xf32>
    %35 = arith.mulf %34, %33 : vector<16x128xf32>
    %36 = arith.addf %31, %35 : vector<16x128xf32>
    %37 = vector.extract_strided_slice %27 {offsets = [2, 0, 0], sizes = [1, 16, 128], strides = [1, 1, 1]} : vector<3x16x128xf32> to vector<1x16x128xf32>
    %38 = vector.shape_cast %37 : vector<1x16x128xf32> to vector<16x128xf32>
    %cst_15 = arith.constant 5.000000e-01 : f32
    %39 = vector.broadcast %cst_15 : f32 to vector<16x128xf32>
    %40 = arith.mulf %39, %38 : vector<16x128xf32>
    %41 = arith.addf %36, %40 : vector<16x128xf32>
    %42 = vector.extract_strided_slice %27 {offsets = [0, 0, 0], sizes = [1, 16, 128], strides = [1, 1, 1]} : vector<3x16x128xf32> to vector<1x16x128xf32>
    %43 = vector.shape_cast %42 : vector<1x16x128xf32> to vector<16x128xf32>
    %cst_16 = arith.constant 5.000000e-01 : f32
    %44 = vector.broadcast %cst_16 : f32 to vector<16x128xf32>
    %45 = arith.mulf %44, %43 : vector<16x128xf32>
    %46 = vector.extract_strided_slice %27 {offsets = [1, 0, 0], sizes = [1, 16, 128], strides = [1, 1, 1]} : vector<3x16x128xf32> to vector<1x16x128xf32>
    %47 = vector.shape_cast %46 : vector<1x16x128xf32> to vector<16x128xf32>
    %cst_17 = arith.constant -4.186880e-01 : f32
    %48 = vector.broadcast %cst_17 : f32 to vector<16x128xf32>
    %49 = arith.mulf %48, %47 : vector<16x128xf32>
    %50 = arith.addf %45, %49 : vector<16x128xf32>
    %51 = vector.extract_strided_slice %27 {offsets = [2, 0, 0], sizes = [1, 16, 128], strides = [1, 1, 1]} : vector<3x16x128xf32> to vector<1x16x128xf32>
    %52 = vector.shape_cast %51 : vector<1x16x128xf32> to vector<16x128xf32>
    %cst_18 = arith.constant -8.131200e-02 : f32
    %53 = vector.broadcast %cst_18 : f32 to vector<16x128xf32>
    %54 = arith.mulf %53, %52 : vector<16x128xf32>
    %55 = arith.addf %50, %54 : vector<16x128xf32>
    %56 = math.absf %41 : vector<16x128xf32>
    %cst_19 = arith.constant dense<0.000000e+00> : vector<128xf32>
    %57 = vector.multi_reduction <add>, %56, %cst_19 [0] : vector<16x128xf32> to vector<128xf32>
    %58 = vector.shape_cast %57 : vector<128xf32> to vector<1x128xf32>
    %59 = math.absf %55 : vector<16x128xf32>
    %cst_20 = arith.constant dense<0.000000e+00> : vector<128xf32>
    %60 = vector.multi_reduction <add>, %59, %cst_20 [0] : vector<16x128xf32> to vector<128xf32>
    %61 = vector.shape_cast %60 : vector<128xf32> to vector<1x128xf32>
    %62 = vector.extract_strided_slice %4 {offsets = [0, 0, 0], sizes = [1, 16, 128], strides = [1, 1, 1]} : vector<3x16x128xf32> to vector<1x16x128xf32>
    %63 = vector.shape_cast %62 : vector<1x16x128xf32> to vector<16x128xf32>
    %cst_21 = arith.constant 2.990000e-01 : f32
    %64 = vector.broadcast %cst_21 : f32 to vector<16x128xf32>
    %65 = arith.mulf %64, %63 : vector<16x128xf32>
    %66 = vector.extract_strided_slice %4 {offsets = [1, 0, 0], sizes = [1, 16, 128], strides = [1, 1, 1]} : vector<3x16x128xf32> to vector<1x16x128xf32>
    %67 = vector.shape_cast %66 : vector<1x16x128xf32> to vector<16x128xf32>
    %cst_22 = arith.constant 5.870000e-01 : f32
    %68 = vector.broadcast %cst_22 : f32 to vector<16x128xf32>
    %69 = arith.mulf %68, %67 : vector<16x128xf32>
    %70 = arith.addf %65, %69 : vector<16x128xf32>
    %71 = vector.extract_strided_slice %4 {offsets = [2, 0, 0], sizes = [1, 16, 128], strides = [1, 1, 1]} : vector<3x16x128xf32> to vector<1x16x128xf32>
    %72 = vector.shape_cast %71 : vector<1x16x128xf32> to vector<16x128xf32>
    %cst_23 = arith.constant 1.140000e-01 : f32
    %73 = vector.broadcast %cst_23 : f32 to vector<16x128xf32>
    %74 = arith.mulf %73, %72 : vector<16x128xf32>
    %75 = arith.addf %70, %74 : vector<16x128xf32>
    %76 = vector.extract_strided_slice %2 {offsets = [0, 0, 0], sizes = [1, 16, 128], strides = [1, 1, 1]} : vector<3x16x128xf32> to vector<1x16x128xf32>
    %77 = vector.shape_cast %76 : vector<1x16x128xf32> to vector<16x128xf32>
    %cst_24 = arith.constant 2.990000e-01 : f32
    %78 = vector.broadcast %cst_24 : f32 to vector<16x128xf32>
    %79 = arith.mulf %78, %77 : vector<16x128xf32>
    %80 = vector.extract_strided_slice %2 {offsets = [1, 0, 0], sizes = [1, 16, 128], strides = [1, 1, 1]} : vector<3x16x128xf32> to vector<1x16x128xf32>
    %81 = vector.shape_cast %80 : vector<1x16x128xf32> to vector<16x128xf32>
    %cst_25 = arith.constant 5.870000e-01 : f32
    %82 = vector.broadcast %cst_25 : f32 to vector<16x128xf32>
    %83 = arith.mulf %82, %81 : vector<16x128xf32>
    %84 = arith.addf %79, %83 : vector<16x128xf32>
    %85 = vector.extract_strided_slice %2 {offsets = [2, 0, 0], sizes = [1, 16, 128], strides = [1, 1, 1]} : vector<3x16x128xf32> to vector<1x16x128xf32>
    %86 = vector.shape_cast %85 : vector<1x16x128xf32> to vector<16x128xf32>
    %cst_26 = arith.constant 1.140000e-01 : f32
    %87 = vector.broadcast %cst_26 : f32 to vector<16x128xf32>
    %88 = arith.mulf %87, %86 : vector<16x128xf32>
    %89 = arith.addf %84, %88 : vector<16x128xf32>
    %90 = vector.extract_strided_slice %6 {offsets = [0, 0, 0], sizes = [1, 16, 128], strides = [1, 1, 1]} : vector<3x16x128xf32> to vector<1x16x128xf32>
    %91 = vector.shape_cast %90 : vector<1x16x128xf32> to vector<16x128xf32>
    %cst_27 = arith.constant 2.990000e-01 : f32
    %92 = vector.broadcast %cst_27 : f32 to vector<16x128xf32>
    %93 = arith.mulf %92, %91 : vector<16x128xf32>
    %94 = vector.extract_strided_slice %6 {offsets = [1, 0, 0], sizes = [1, 16, 128], strides = [1, 1, 1]} : vector<3x16x128xf32> to vector<1x16x128xf32>
    %95 = vector.shape_cast %94 : vector<1x16x128xf32> to vector<16x128xf32>
    %cst_28 = arith.constant 5.870000e-01 : f32
    %96 = vector.broadcast %cst_28 : f32 to vector<16x128xf32>
    %97 = arith.mulf %96, %95 : vector<16x128xf32>
    %98 = arith.addf %93, %97 : vector<16x128xf32>
    %99 = vector.extract_strided_slice %6 {offsets = [2, 0, 0], sizes = [1, 16, 128], strides = [1, 1, 1]} : vector<3x16x128xf32> to vector<1x16x128xf32>
    %100 = vector.shape_cast %99 : vector<1x16x128xf32> to vector<16x128xf32>
    %cst_29 = arith.constant 1.140000e-01 : f32
    %101 = vector.broadcast %cst_29 : f32 to vector<16x128xf32>
    %102 = arith.mulf %101, %100 : vector<16x128xf32>
    %103 = arith.addf %98, %102 : vector<16x128xf32>
    %104 = vector.extract_strided_slice %75 {offsets = [0, 0], sizes = [1, 128], strides = [1, 1]} : vector<16x128xf32> to vector<1x128xf32>
    %c0_30 = arith.constant 0 : index
    %c0_31 = arith.constant 0 : index
    %105 = vector.load %arg6[%c0_30, %c0_31] : memref<8x128xf32, #tpu.memory_space<vmem>>, vector<1x128xf32>
    %106 = arith.select %0, %104, %105 : vector<1x128xf32>
    %c1 = arith.constant 1 : index
    %c0_32 = arith.constant 0 : index
    %107 = vector.load %arg6[%c1, %c0_32] : memref<8x128xf32, #tpu.memory_space<vmem>>, vector<1x128xf32>
    %108 = arith.select %0, %104, %107 : vector<1x128xf32>
    %c1_i32 = arith.constant 1 : i32
    %109 = tpu.dynamic_rotate %75 by %c1_i32 dim 0 : vector<16x128xf32>, i32 -> vector<16x128xf32>
    %110 = vector.shape_cast %108 : vector<1x128xf32> to vector<1x128xf32>
    %111 = vector.broadcast %110 : vector<1x128xf32> to vector<16x128xf32>
    %112 = arith.select %14, %111, %109 : vector<16x128xi1>, vector<16x128xf32>
    %c1_i32_33 = arith.constant 1 : i32
    %113 = tpu.dynamic_rotate %112 by %c1_i32_33 dim 0 : vector<16x128xf32>, i32 -> vector<16x128xf32>
    %114 = vector.shape_cast %106 : vector<1x128xf32> to vector<1x128xf32>
    %115 = vector.broadcast %114 : vector<1x128xf32> to vector<16x128xf32>
    %116 = arith.select %14, %115, %113 : vector<16x128xi1>, vector<16x128xf32>
    %cst_34 = arith.constant 2.000000e+00 : f32
    %117 = vector.broadcast %cst_34 : f32 to vector<16x128xf32>
    %118 = arith.mulf %117, %112 : vector<16x128xf32>
    %119 = arith.addf %116, %118 : vector<16x128xf32>
    %120 = arith.addf %119, %75 : vector<16x128xf32>
    %121 = arith.subf %75, %116 : vector<16x128xf32>
    %c127_i32_35 = arith.constant 127 : i32
    %122 = tpu.dynamic_rotate %120 by %c127_i32_35 dim 1 : vector<16x128xf32>, i32 -> vector<16x128xf32>
    %123 = arith.select %11, %120, %122 : vector<16x128xi1>, vector<16x128xf32>
    %c1_i32_36 = arith.constant 1 : i32
    %124 = tpu.dynamic_rotate %120 by %c1_i32_36 dim 1 : vector<16x128xf32>, i32 -> vector<16x128xf32>
    %125 = arith.select %9, %120, %124 : vector<16x128xi1>, vector<16x128xf32>
    %126 = arith.subf %123, %125 : vector<16x128xf32>
    %127 = math.absf %126 : vector<16x128xf32>
    %c1_i32_37 = arith.constant 1 : i32
    %128 = tpu.dynamic_rotate %121 by %c1_i32_37 dim 1 : vector<16x128xf32>, i32 -> vector<16x128xf32>
    %129 = arith.select %9, %121, %128 : vector<16x128xi1>, vector<16x128xf32>
    %cst_38 = arith.constant 2.000000e+00 : f32
    %130 = vector.broadcast %cst_38 : f32 to vector<16x128xf32>
    %131 = arith.mulf %130, %121 : vector<16x128xf32>
    %132 = arith.addf %129, %131 : vector<16x128xf32>
    %c127_i32_39 = arith.constant 127 : i32
    %133 = tpu.dynamic_rotate %121 by %c127_i32_39 dim 1 : vector<16x128xf32>, i32 -> vector<16x128xf32>
    %134 = arith.select %11, %121, %133 : vector<16x128xi1>, vector<16x128xf32>
    %135 = arith.addf %132, %134 : vector<16x128xf32>
    %136 = math.absf %135 : vector<16x128xf32>
    %137 = vector.extract_strided_slice %89 {offsets = [0, 0], sizes = [1, 128], strides = [1, 1]} : vector<16x128xf32> to vector<1x128xf32>
    %c2 = arith.constant 2 : index
    %c0_40 = arith.constant 0 : index
    %138 = vector.load %arg6[%c2, %c0_40] : memref<8x128xf32, #tpu.memory_space<vmem>>, vector<1x128xf32>
    %139 = arith.select %0, %137, %138 : vector<1x128xf32>
    %c3 = arith.constant 3 : index
    %c0_41 = arith.constant 0 : index
    %140 = vector.load %arg6[%c3, %c0_41] : memref<8x128xf32, #tpu.memory_space<vmem>>, vector<1x128xf32>
    %141 = arith.select %0, %137, %140 : vector<1x128xf32>
    %c1_i32_42 = arith.constant 1 : i32
    %142 = tpu.dynamic_rotate %89 by %c1_i32_42 dim 0 : vector<16x128xf32>, i32 -> vector<16x128xf32>
    %143 = vector.shape_cast %141 : vector<1x128xf32> to vector<1x128xf32>
    %144 = vector.broadcast %143 : vector<1x128xf32> to vector<16x128xf32>
    %145 = arith.select %14, %144, %142 : vector<16x128xi1>, vector<16x128xf32>
    %c1_i32_43 = arith.constant 1 : i32
    %146 = tpu.dynamic_rotate %145 by %c1_i32_43 dim 0 : vector<16x128xf32>, i32 -> vector<16x128xf32>
    %147 = vector.shape_cast %139 : vector<1x128xf32> to vector<1x128xf32>
    %148 = vector.broadcast %147 : vector<1x128xf32> to vector<16x128xf32>
    %149 = arith.select %14, %148, %146 : vector<16x128xi1>, vector<16x128xf32>
    %cst_44 = arith.constant 2.000000e+00 : f32
    %150 = vector.broadcast %cst_44 : f32 to vector<16x128xf32>
    %151 = arith.mulf %150, %145 : vector<16x128xf32>
    %152 = arith.addf %149, %151 : vector<16x128xf32>
    %153 = arith.addf %152, %89 : vector<16x128xf32>
    %154 = arith.subf %89, %149 : vector<16x128xf32>
    %c127_i32_45 = arith.constant 127 : i32
    %155 = tpu.dynamic_rotate %153 by %c127_i32_45 dim 1 : vector<16x128xf32>, i32 -> vector<16x128xf32>
    %156 = arith.select %11, %153, %155 : vector<16x128xi1>, vector<16x128xf32>
    %c1_i32_46 = arith.constant 1 : i32
    %157 = tpu.dynamic_rotate %153 by %c1_i32_46 dim 1 : vector<16x128xf32>, i32 -> vector<16x128xf32>
    %158 = arith.select %9, %153, %157 : vector<16x128xi1>, vector<16x128xf32>
    %159 = arith.subf %156, %158 : vector<16x128xf32>
    %160 = math.absf %159 : vector<16x128xf32>
    %c1_i32_47 = arith.constant 1 : i32
    %161 = tpu.dynamic_rotate %154 by %c1_i32_47 dim 1 : vector<16x128xf32>, i32 -> vector<16x128xf32>
    %162 = arith.select %9, %154, %161 : vector<16x128xi1>, vector<16x128xf32>
    %cst_48 = arith.constant 2.000000e+00 : f32
    %163 = vector.broadcast %cst_48 : f32 to vector<16x128xf32>
    %164 = arith.mulf %163, %154 : vector<16x128xf32>
    %165 = arith.addf %162, %164 : vector<16x128xf32>
    %c127_i32_49 = arith.constant 127 : i32
    %166 = tpu.dynamic_rotate %154 by %c127_i32_49 dim 1 : vector<16x128xf32>, i32 -> vector<16x128xf32>
    %167 = arith.select %11, %154, %166 : vector<16x128xi1>, vector<16x128xf32>
    %168 = arith.addf %165, %167 : vector<16x128xf32>
    %169 = math.absf %168 : vector<16x128xf32>
    %170 = vector.extract_strided_slice %103 {offsets = [0, 0], sizes = [1, 128], strides = [1, 1]} : vector<16x128xf32> to vector<1x128xf32>
    %c4 = arith.constant 4 : index
    %c0_50 = arith.constant 0 : index
    %171 = vector.load %arg6[%c4, %c0_50] : memref<8x128xf32, #tpu.memory_space<vmem>>, vector<1x128xf32>
    %172 = arith.select %0, %170, %171 : vector<1x128xf32>
    %c5 = arith.constant 5 : index
    %c0_51 = arith.constant 0 : index
    %173 = vector.load %arg6[%c5, %c0_51] : memref<8x128xf32, #tpu.memory_space<vmem>>, vector<1x128xf32>
    %174 = arith.select %0, %170, %173 : vector<1x128xf32>
    %c1_i32_52 = arith.constant 1 : i32
    %175 = tpu.dynamic_rotate %103 by %c1_i32_52 dim 0 : vector<16x128xf32>, i32 -> vector<16x128xf32>
    %176 = vector.shape_cast %174 : vector<1x128xf32> to vector<1x128xf32>
    %177 = vector.broadcast %176 : vector<1x128xf32> to vector<16x128xf32>
    %178 = arith.select %14, %177, %175 : vector<16x128xi1>, vector<16x128xf32>
    %c1_i32_53 = arith.constant 1 : i32
    %179 = tpu.dynamic_rotate %178 by %c1_i32_53 dim 0 : vector<16x128xf32>, i32 -> vector<16x128xf32>
    %180 = vector.shape_cast %172 : vector<1x128xf32> to vector<1x128xf32>
    %181 = vector.broadcast %180 : vector<1x128xf32> to vector<16x128xf32>
    %182 = arith.select %14, %181, %179 : vector<16x128xi1>, vector<16x128xf32>
    %cst_54 = arith.constant 2.000000e+00 : f32
    %183 = vector.broadcast %cst_54 : f32 to vector<16x128xf32>
    %184 = arith.mulf %183, %178 : vector<16x128xf32>
    %185 = arith.addf %182, %184 : vector<16x128xf32>
    %186 = arith.addf %185, %103 : vector<16x128xf32>
    %187 = arith.subf %103, %182 : vector<16x128xf32>
    %c127_i32_55 = arith.constant 127 : i32
    %188 = tpu.dynamic_rotate %186 by %c127_i32_55 dim 1 : vector<16x128xf32>, i32 -> vector<16x128xf32>
    %189 = arith.select %11, %186, %188 : vector<16x128xi1>, vector<16x128xf32>
    %c1_i32_56 = arith.constant 1 : i32
    %190 = tpu.dynamic_rotate %186 by %c1_i32_56 dim 1 : vector<16x128xf32>, i32 -> vector<16x128xf32>
    %191 = arith.select %9, %186, %190 : vector<16x128xi1>, vector<16x128xf32>
    %192 = arith.subf %189, %191 : vector<16x128xf32>
    %193 = math.absf %192 : vector<16x128xf32>
    %c1_i32_57 = arith.constant 1 : i32
    %194 = tpu.dynamic_rotate %187 by %c1_i32_57 dim 1 : vector<16x128xf32>, i32 -> vector<16x128xf32>
    %195 = arith.select %9, %187, %194 : vector<16x128xi1>, vector<16x128xf32>
    %cst_58 = arith.constant 2.000000e+00 : f32
    %196 = vector.broadcast %cst_58 : f32 to vector<16x128xf32>
    %197 = arith.mulf %196, %187 : vector<16x128xf32>
    %198 = arith.addf %195, %197 : vector<16x128xf32>
    %c127_i32_59 = arith.constant 127 : i32
    %199 = tpu.dynamic_rotate %187 by %c127_i32_59 dim 1 : vector<16x128xf32>, i32 -> vector<16x128xf32>
    %200 = arith.select %11, %187, %199 : vector<16x128xi1>, vector<16x128xf32>
    %201 = arith.addf %198, %200 : vector<16x128xf32>
    %202 = math.absf %201 : vector<16x128xf32>
    %203 = arith.maximumf %127, %160 : vector<16x128xf32>
    %204 = arith.subf %193, %203 : vector<16x128xf32>
    %205 = arith.maximumf %136, %169 : vector<16x128xf32>
    %206 = arith.subf %202, %205 : vector<16x128xf32>
    %207 = arith.mulf %204, %204 : vector<16x128xf32>
    %208 = arith.mulf %206, %206 : vector<16x128xf32>
    %cst_60 = arith.constant dense<0.000000e+00> : vector<128xf32>
    %209 = vector.multi_reduction <add>, %207, %cst_60 [0] : vector<16x128xf32> to vector<128xf32>
    %210 = vector.shape_cast %209 : vector<128xf32> to vector<1x128xf32>
    %211 = vector.extract_strided_slice %207 {offsets = [0, 0], sizes = [1, 128], strides = [1, 1]} : vector<16x128xf32> to vector<1x128xf32>
    %cst_61 = arith.constant 0.000000e+00 : f32
    %212 = vector.broadcast %cst_61 : f32 to vector<1x128xf32>
    %213 = arith.select %0, %211, %212 : vector<1x128xf32>
    %214 = arith.subf %210, %213 : vector<1x128xf32>
    %cst_62 = arith.constant dense<0.000000e+00> : vector<128xf32>
    %215 = vector.multi_reduction <add>, %208, %cst_62 [0] : vector<16x128xf32> to vector<128xf32>
    %216 = vector.shape_cast %215 : vector<128xf32> to vector<1x128xf32>
    %cst_63 = arith.constant 0.000000e+00 : f32
    %217 = vector.broadcast %cst_63 : f32 to vector<3x128xf32>
    %218 = tpu.concatenate %26, %58, %61, %214, %216, %217 in 0 : vector<1x128xf32>, vector<1x128xf32>, vector<1x128xf32>, vector<1x128xf32>, vector<1x128xf32>, vector<3x128xf32> -> vector<8x128xf32>
    %c0_64 = arith.constant 0 : index
    %c0_65 = arith.constant 0 : index
    %c0_66 = arith.constant 0 : index
    %219 = vector.load %arg5[%c0_64, %c0_65, %c0_66] : memref<1x8x128xf32, #tpu.memory_space<vmem>>, vector<1x8x128xf32>
    %220 = vector.shape_cast %219 : vector<1x8x128xf32> to vector<8x128xf32>
    %221 = arith.addf %220, %218 : vector<8x128xf32>
    %222 = arith.select %0, %218, %221 : vector<8x128xf32>
    %c0_67 = arith.constant 0 : index
    %c0_68 = arith.constant 0 : index
    %c0_69 = arith.constant 0 : index
    %223 = vector.load %arg5[%c0_67, %c0_68, %c0_69] : memref<1x8x128xf32, #tpu.memory_space<vmem>>, vector<1x8x128xf32>
    %224 = vector.shape_cast %223 : vector<1x8x128xf32> to vector<8x128xf32>
    %225 = vector.shape_cast %222 : vector<8x128xf32> to vector<1x8x128xf32>
    tpu.vector_store %arg5[%c0_67, %c0_68, %c0_69], %225 {strides = array<i32>} : memref<1x8x128xf32, #tpu.memory_space<vmem>>, vector<1x8x128xf32>,
    %c0_i32_70 = arith.constant 0 : i32
    %226 = arith.cmpi eq, %arg1, %c0_i32_70 : i32
    %227 = arith.extui %226 : i1 to i32
    %c0_i32_71 = arith.constant 0 : i32
    %228 = arith.cmpi ne, %227, %c0_i32_71 : i32
    scf.if %228 {
      %235 = vector.extract_strided_slice %75 {offsets = [14, 0], sizes = [1, 128], strides = [1, 1]} : vector<16x128xf32> to vector<1x128xf32>
      %236 = vector.extract_strided_slice %75 {offsets = [15, 0], sizes = [1, 128], strides = [1, 1]} : vector<16x128xf32> to vector<1x128xf32>
      %cst_75 = arith.constant 3.000000e+00 : f32
      %237 = vector.broadcast %cst_75 : f32 to vector<1x128xf32>
      %238 = arith.mulf %237, %236 : vector<1x128xf32>
      %239 = arith.addf %235, %238 : vector<1x128xf32>
      %240 = vector.extract_strided_slice %75 {offsets = [15, 0], sizes = [1, 128], strides = [1, 1]} : vector<16x128xf32> to vector<1x128xf32>
      %241 = vector.extract_strided_slice %75 {offsets = [14, 0], sizes = [1, 128], strides = [1, 1]} : vector<16x128xf32> to vector<1x128xf32>
      %242 = arith.subf %240, %241 : vector<1x128xf32>
      %243 = vector.extract_strided_slice %239 {offsets = [0, 1], sizes = [1, 127], strides = [1, 1]} : vector<1x128xf32> to vector<1x127xf32>
      %244 = vector.extract_strided_slice %239 {offsets = [0, 127], sizes = [1, 1], strides = [1, 1]} : vector<1x128xf32> to vector<1x1xf32>
      %245 = tpu.concatenate %243, %244 in 1 : vector<1x127xf32>, vector<1x1xf32> -> vector<1x128xf32>
      %246 = vector.extract_strided_slice %239 {offsets = [0, 0], sizes = [1, 1], strides = [1, 1]} : vector<1x128xf32> to vector<1x1xf32>
      %247 = vector.extract_strided_slice %239 {offsets = [0, 0], sizes = [1, 127], strides = [1, 1]} : vector<1x128xf32> to vector<1x127xf32>
      %248 = tpu.concatenate %246, %247 in 1 : vector<1x1xf32>, vector<1x127xf32> -> vector<1x128xf32>
      %249 = arith.subf %245, %248 : vector<1x128xf32>
      %250 = math.absf %249 : vector<1x128xf32>
      %251 = vector.extract_strided_slice %242 {offsets = [0, 0], sizes = [1, 1], strides = [1, 1]} : vector<1x128xf32> to vector<1x1xf32>
      %252 = vector.extract_strided_slice %242 {offsets = [0, 0], sizes = [1, 127], strides = [1, 1]} : vector<1x128xf32> to vector<1x127xf32>
      %253 = tpu.concatenate %251, %252 in 1 : vector<1x1xf32>, vector<1x127xf32> -> vector<1x128xf32>
      %cst_76 = arith.constant 2.000000e+00 : f32
      %254 = vector.broadcast %cst_76 : f32 to vector<1x128xf32>
      %255 = arith.mulf %254, %242 : vector<1x128xf32>
      %256 = arith.addf %253, %255 : vector<1x128xf32>
      %257 = vector.extract_strided_slice %242 {offsets = [0, 1], sizes = [1, 127], strides = [1, 1]} : vector<1x128xf32> to vector<1x127xf32>
      %258 = vector.extract_strided_slice %242 {offsets = [0, 127], sizes = [1, 1], strides = [1, 1]} : vector<1x128xf32> to vector<1x1xf32>
      %259 = tpu.concatenate %257, %258 in 1 : vector<1x127xf32>, vector<1x1xf32> -> vector<1x128xf32>
      %260 = arith.addf %256, %259 : vector<1x128xf32>
      %261 = math.absf %260 : vector<1x128xf32>
      %262 = vector.extract_strided_slice %89 {offsets = [14, 0], sizes = [1, 128], strides = [1, 1]} : vector<16x128xf32> to vector<1x128xf32>
      %263 = vector.extract_strided_slice %89 {offsets = [15, 0], sizes = [1, 128], strides = [1, 1]} : vector<16x128xf32> to vector<1x128xf32>
      %cst_77 = arith.constant 3.000000e+00 : f32
      %264 = vector.broadcast %cst_77 : f32 to vector<1x128xf32>
      %265 = arith.mulf %264, %263 : vector<1x128xf32>
      %266 = arith.addf %262, %265 : vector<1x128xf32>
      %267 = vector.extract_strided_slice %89 {offsets = [15, 0], sizes = [1, 128], strides = [1, 1]} : vector<16x128xf32> to vector<1x128xf32>
      %268 = vector.extract_strided_slice %89 {offsets = [14, 0], sizes = [1, 128], strides = [1, 1]} : vector<16x128xf32> to vector<1x128xf32>
      %269 = arith.subf %267, %268 : vector<1x128xf32>
      %270 = vector.extract_strided_slice %266 {offsets = [0, 1], sizes = [1, 127], strides = [1, 1]} : vector<1x128xf32> to vector<1x127xf32>
      %271 = vector.extract_strided_slice %266 {offsets = [0, 127], sizes = [1, 1], strides = [1, 1]} : vector<1x128xf32> to vector<1x1xf32>
      %272 = tpu.concatenate %270, %271 in 1 : vector<1x127xf32>, vector<1x1xf32> -> vector<1x128xf32>
      %273 = vector.extract_strided_slice %266 {offsets = [0, 0], sizes = [1, 1], strides = [1, 1]} : vector<1x128xf32> to vector<1x1xf32>
      %274 = vector.extract_strided_slice %266 {offsets = [0, 0], sizes = [1, 127], strides = [1, 1]} : vector<1x128xf32> to vector<1x127xf32>
      %275 = tpu.concatenate %273, %274 in 1 : vector<1x1xf32>, vector<1x127xf32> -> vector<1x128xf32>
      %276 = arith.subf %272, %275 : vector<1x128xf32>
      %277 = math.absf %276 : vector<1x128xf32>
      %278 = vector.extract_strided_slice %269 {offsets = [0, 0], sizes = [1, 1], strides = [1, 1]} : vector<1x128xf32> to vector<1x1xf32>
      %279 = vector.extract_strided_slice %269 {offsets = [0, 0], sizes = [1, 127], strides = [1, 1]} : vector<1x128xf32> to vector<1x127xf32>
      %280 = tpu.concatenate %278, %279 in 1 : vector<1x1xf32>, vector<1x127xf32> -> vector<1x128xf32>
      %cst_78 = arith.constant 2.000000e+00 : f32
      %281 = vector.broadcast %cst_78 : f32 to vector<1x128xf32>
      %282 = arith.mulf %281, %269 : vector<1x128xf32>
      %283 = arith.addf %280, %282 : vector<1x128xf32>
      %284 = vector.extract_strided_slice %269 {offsets = [0, 1], sizes = [1, 127], strides = [1, 1]} : vector<1x128xf32> to vector<1x127xf32>
      %285 = vector.extract_strided_slice %269 {offsets = [0, 127], sizes = [1, 1], strides = [1, 1]} : vector<1x128xf32> to vector<1x1xf32>
      %286 = tpu.concatenate %284, %285 in 1 : vector<1x127xf32>, vector<1x1xf32> -> vector<1x128xf32>
      %287 = arith.addf %283, %286 : vector<1x128xf32>
      %288 = math.absf %287 : vector<1x128xf32>
      %289 = vector.extract_strided_slice %103 {offsets = [14, 0], sizes = [1, 128], strides = [1, 1]} : vector<16x128xf32> to vector<1x128xf32>
      %290 = vector.extract_strided_slice %103 {offsets = [15, 0], sizes = [1, 128], strides = [1, 1]} : vector<16x128xf32> to vector<1x128xf32>
      %cst_79 = arith.constant 3.000000e+00 : f32
      %291 = vector.broadcast %cst_79 : f32 to vector<1x128xf32>
      %292 = arith.mulf %291, %290 : vector<1x128xf32>
      %293 = arith.addf %289, %292 : vector<1x128xf32>
      %294 = vector.extract_strided_slice %103 {offsets = [15, 0], sizes = [1, 128], strides = [1, 1]} : vector<16x128xf32> to vector<1x128xf32>
      %295 = vector.extract_strided_slice %103 {offsets = [14, 0], sizes = [1, 128], strides = [1, 1]} : vector<16x128xf32> to vector<1x128xf32>
      %296 = arith.subf %294, %295 : vector<1x128xf32>
      %297 = vector.extract_strided_slice %293 {offsets = [0, 1], sizes = [1, 127], strides = [1, 1]} : vector<1x128xf32> to vector<1x127xf32>
      %298 = vector.extract_strided_slice %293 {offsets = [0, 127], sizes = [1, 1], strides = [1, 1]} : vector<1x128xf32> to vector<1x1xf32>
      %299 = tpu.concatenate %297, %298 in 1 : vector<1x127xf32>, vector<1x1xf32> -> vector<1x128xf32>
      %300 = vector.extract_strided_slice %293 {offsets = [0, 0], sizes = [1, 1], strides = [1, 1]} : vector<1x128xf32> to vector<1x1xf32>
      %301 = vector.extract_strided_slice %293 {offsets = [0, 0], sizes = [1, 127], strides = [1, 1]} : vector<1x128xf32> to vector<1x127xf32>
      %302 = tpu.concatenate %300, %301 in 1 : vector<1x1xf32>, vector<1x127xf32> -> vector<1x128xf32>
      %303 = arith.subf %299, %302 : vector<1x128xf32>
      %304 = math.absf %303 : vector<1x128xf32>
      %305 = vector.extract_strided_slice %296 {offsets = [0, 0], sizes = [1, 1], strides = [1, 1]} : vector<1x128xf32> to vector<1x1xf32>
      %306 = vector.extract_strided_slice %296 {offsets = [0, 0], sizes = [1, 127], strides = [1, 1]} : vector<1x128xf32> to vector<1x127xf32>
      %307 = tpu.concatenate %305, %306 in 1 : vector<1x1xf32>, vector<1x127xf32> -> vector<1x128xf32>
      %cst_80 = arith.constant 2.000000e+00 : f32
      %308 = vector.broadcast %cst_80 : f32 to vector<1x128xf32>
      %309 = arith.mulf %308, %296 : vector<1x128xf32>
      %310 = arith.addf %307, %309 : vector<1x128xf32>
      %311 = vector.extract_strided_slice %296 {offsets = [0, 1], sizes = [1, 127], strides = [1, 1]} : vector<1x128xf32> to vector<1x127xf32>
      %312 = vector.extract_strided_slice %296 {offsets = [0, 127], sizes = [1, 1], strides = [1, 1]} : vector<1x128xf32> to vector<1x1xf32>
      %313 = tpu.concatenate %311, %312 in 1 : vector<1x127xf32>, vector<1x1xf32> -> vector<1x128xf32>
      %314 = arith.addf %310, %313 : vector<1x128xf32>
      %315 = math.absf %314 : vector<1x128xf32>
      %316 = arith.maximumf %250, %277 : vector<1x128xf32>
      %317 = arith.subf %304, %316 : vector<1x128xf32>
      %318 = arith.maximumf %261, %288 : vector<1x128xf32>
      %319 = arith.subf %315, %318 : vector<1x128xf32>
      %c0_81 = arith.constant 0 : index
      %c3_82 = arith.constant 3 : index
      %c0_83 = arith.constant 0 : index
      %320 = vector.load %arg5[%c0_81, %c3_82, %c0_83] : memref<1x8x128xf32, #tpu.memory_space<vmem>>, vector<1x2x128xf32>
      %321 = vector.shape_cast %320 : vector<1x2x128xf32> to vector<2x128xf32>
      %322 = arith.mulf %317, %317 : vector<1x128xf32>
      %323 = arith.mulf %319, %319 : vector<1x128xf32>
      %324 = tpu.concatenate %322, %323 in 0 : vector<1x128xf32>, vector<1x128xf32> -> vector<2x128xf32>
      %325 = arith.addf %321, %324 : vector<2x128xf32>
      %c0_84 = arith.constant 0 : index
      %c3_85 = arith.constant 3 : index
      %c0_86 = arith.constant 0 : index
      %326 = vector.load %arg5[%c0_84, %c3_85, %c0_86] : memref<1x8x128xf32, #tpu.memory_space<vmem>>, vector<1x2x128xf32>
      %327 = vector.shape_cast %326 : vector<1x2x128xf32> to vector<2x128xf32>
      %328 = vector.shape_cast %325 : vector<2x128xf32> to vector<1x2x128xf32>
      tpu.vector_store %arg5[%c0_84, %c3_85, %c0_86], %328 {strides = array<i32>} : memref<1x8x128xf32, #tpu.memory_space<vmem>>, vector<1x2x128xf32>,
    } else {
    }
    %229 = vector.extract_strided_slice %75 {offsets = [14, 0], sizes = [2, 128], strides = [1, 1]} : vector<16x128xf32> to vector<2x128xf32>
    %230 = vector.extract_strided_slice %89 {offsets = [14, 0], sizes = [2, 128], strides = [1, 1]} : vector<16x128xf32> to vector<2x128xf32>
    %231 = vector.extract_strided_slice %103 {offsets = [14, 0], sizes = [2, 128], strides = [1, 1]} : vector<16x128xf32> to vector<2x128xf32>
    %cst_72 = arith.constant 0.000000e+00 : f32
    %232 = vector.broadcast %cst_72 : f32 to vector<2x128xf32>
    %233 = tpu.concatenate %229, %230, %231, %232 in 0 : vector<2x128xf32>, vector<2x128xf32>, vector<2x128xf32>, vector<2x128xf32> -> vector<8x128xf32>
    %c0_73 = arith.constant 0 : index
    %c0_74 = arith.constant 0 : index
    %234 = vector.load %arg6[%c0_73, %c0_74] : memref<8x128xf32, #tpu.memory_space<vmem>>, vector<8x128xf32>
    tpu.vector_store %arg6[%c0_73, %c0_74], %233 {strides = array<i32>} : memref<8x128xf32, #tpu.memory_space<vmem>>, vector<8x128xf32>,
    return
  }
  func.func @transform_0(%arg0: i32, %arg1: i32) -> (i32, i32, i32, i32) {
    %c0_i32 = arith.constant 0 : i32
    %c0_i32_0 = arith.constant 0 : i32
    %c0_i32_1 = arith.constant 0 : i32
    return %arg0, %c0_i32, %arg1, %c0_i32_0 : i32, i32, i32, i32
  }
  func.func @transform_1(%arg0: i32, %arg1: i32) -> (i32, i32, i32, i32) {
    %c0_i32 = arith.constant 0 : i32
    %c0_i32_0 = arith.constant 0 : i32
    %c0_i32_1 = arith.constant 0 : i32
    return %arg0, %c0_i32, %arg1, %c0_i32_0 : i32, i32, i32, i32
  }
  func.func @transform_2(%arg0: i32, %arg1: i32) -> (i32, i32, i32, i32) {
    %c0_i32 = arith.constant 0 : i32
    %c0_i32_0 = arith.constant 0 : i32
    %c0_i32_1 = arith.constant 0 : i32
    return %arg0, %c0_i32, %arg1, %c0_i32_0 : i32, i32, i32, i32
  }
  func.func @transform_3(%arg0: i32, %arg1: i32) -> (i32, i32, i32) {
    %c0_i32 = arith.constant 0 : i32
    %c0_i32_0 = arith.constant 0 : i32
    %c0_i32_1 = arith.constant 0 : i32
    return %arg0, %c0_i32, %c0_i32_0 : i32, i32, i32
  }
}

</mosaic_0001>

<llo_original>
// kernel: tpu_custom_call.1
$region0: #{tpu_custom_call.1}
  #allocation0 [shape = 'u32[]', space=smem, size = 0x4, offset = 0x4, fixed_abs, tag = 'smem constant byte address 0x4 - core index']
  #allocation1 [shape = 'u32[144,128]{1,0:T(1,128)}', space=vmem, size = 0x12000, scoped, tag = 'internal scratch']
  #allocation2 [shape = 'f32[8,128]{1,0:T(8,128)}', space=vmem, size = 0x1000, scoped, tag = 'scratch operand']
  %s0 = inlined_call_operand.hbm [shape: f32[2,3,16,128], index: 0, kind: input, shape index: {}]
  %s1 = inlined_call_operand.hbm [shape: f32[2,3,16,128], index: 1, kind: input, shape index: {}]
  %s2 = inlined_call_operand.hbm [shape: f32[2,3,16,128], index: 2, kind: input, shape index: {}]
  %s3 = inlined_call_operand.hbm [shape: f32[2,8,128], index: 3, kind: output, shape index: {}]
  %s4 = sld [smem:[#allocation0]]
  $region61: #{tpu_custom_call.1} parent=0
    _
  %s6 = ssub.s32 1, %s4
  %s7 = scalar_select 0, %s6, %s4
  $region1: #{tpu_custom_call.1} parent=0
    #allocation3 [shape = 'u8[49152]{0}', space=vmem, size = 0xc000, scoped, tag = 'input window, operand 0']
    #allocation4 [shape = 's32[2]{0}', space=sflag, size = 0x8, scoped, tag = 'scoped memory for tpu_custom_call.1']
    #allocation5 [shape = 's32[2]{0}', space=sflag, size = 0x8, scoped, tag = 'scoped memory for tpu_custom_call.1']
    #allocation6 [shape = 'u8[49152]{0}', space=vmem, size = 0xc000, scoped, tag = 'input window, operand 1']
    #allocation7 [shape = 's32[2]{0}', space=sflag, size = 0x8, scoped, tag = 'scoped memory for tpu_custom_call.1']
    #allocation8 [shape = 'u8[49152]{0}', space=vmem, size = 0xc000, scoped, tag = 'input window, operand 2']
    #allocation9 [shape = 'u8[8192]{0}', space=vmem, size = 0x2000, scoped, tag = 'output window, operand 0']
    %8 = vsyncpa [#allocation4], 0
    %s9 = scalar_lea.sflag [#allocation4], 1
    %10 = vsyncpa %s9, 0
    %11 = vsyncpa [#allocation7], 0
    %s12 = scalar_lea.sflag [#allocation7], 1
    %13 = vsyncpa %s12, 0
    %14 = vsyncpa [#allocation5], 0
    %s15 = scalar_lea.sflag [#allocation5], 1
    %16 = vsyncpa %s15, 0
    loop: start=0, step=1, limit=4
    $region2: #{tpu_custom_call.1} parent=1 // loop_pre_header
      _
    $region3: #{tpu_custom_call.1} parent=1 // loop_header
      %s18 = sphi 0, %s22
      %p19 = scmp.ge.s32.totalorder %s18, 4
      %s25 = sphi 0, %s37
      %s26 = sphi 0, %s33
      %s27 = sphi 0, %s25
      %s28 = sphi 0, %s26
      %s29 = sphi 0, %s27
      %s30 = sphi 0, %s28
      %s42 = sphi 0, %s44
      %s45 = sphi 0, %s42
      %s46 = sphi 0, %s45
      %s62 = sphi 0, %s46
      %s70 = sphi 0, %s72
      %s73 = sphi 0, %s70
      %s74 = sphi 0, %s73
      %s90 = sphi 0, %s74
      %s98 = sphi 0, %s100
      %s101 = sphi 0, %s98
      %s102 = sphi 0, %s101
      %s118 = sphi 0, %s102
      %s124 = sphi 0, %s126
      %s127 = sphi 0, %s124
      %s128 = sphi 0, %s127
      %s144 = sphi 0, %s128
    $region4: #{tpu_custom_call.1} parent=1 // loop_header_branch
      %21 = sbr.rel (%p19) target = $region8
    $region5: #{tpu_custom_call.1} parent=1 // loop_body
      %s23 = ssub.s32 %s18, 1
      %s24 = ssub.s32 %s18, 2
      %s31 = sadd.s32 1, %s26
      %p32 = scmp.ge.s32.totalorder %s31, 1
      %s33 = scalar_select %p32, 0, %s31
      %s34 = sadd.s32 1, %s25
      %s35 = scalar_select %p32, %s34, %s25
      %p36 = scmp.ge.s32.totalorder %s35, 2
      %s37 = scalar_select %p36, 0, %s35
      %s38 = ssub.s32 %s25, %s37
      %s39 = ssub.s32 %s26, %s33
      %s40 = sor.u32 %s38, %s39
      %p41 = scmp.eq.s32.totalorder %s40, 0
      %s43 = sadd.s32 %s42, 1
      %s44 = scalar_select %p41, %s42, %s43
      %p47 = pneg %p41
      %p48 = scmp.eq.s32.totalorder %s18, 1
      %p49 = por %p47, %p48
      %p50 = scmp.ne.s32.totalorder %s42, %s45
      %p51 = scmp.eq.s32.totalorder %s18, 0
      %p52 = por %p50, %p51
      %p53 = scmp.ne.s32.totalorder %s42, %s45
      %p54 = scmp.eq.s32.totalorder %s23, 1
      %p55 = por %p53, %p54
      %p56 = scmp.ne.s32.totalorder %s45, %s46
      %p57 = scmp.eq.s32.totalorder %s23, 0
      %p58 = por %p56, %p57
      %p59 = scmp.ne.s32.totalorder %s45, %s46
      %p60 = scmp.eq.s32.totalorder %s24, 1
      %p61 = por %p59, %p60
      %p63 = scmp.ne.s32.totalorder %s46, %s62
      %p64 = scmp.eq.s32.totalorder %s24, 0
      %p65 = por %p63, %p64
      %s66 = ssub.s32 %s25, %s37
      %s67 = ssub.s32 %s26, %s33
      %s68 = sor.u32 %s66, %s67
      %p69 = scmp.eq.s32.totalorder %s68, 0
      %s71 = sadd.s32 %s70, 1
      %s72 = scalar_select %p69, %s70, %s71
      %p75 = pneg %p69
      %p76 = scmp.eq.s32.totalorder %s18, 1
      %p77 = por %p75, %p76
      %p78 = scmp.ne.s32.totalorder %s70, %s73
      %p79 = scmp.eq.s32.totalorder %s18, 0
      %p80 = por %p78, %p79
      %p81 = scmp.ne.s32.totalorder %s70, %s73
      %p82 = scmp.eq.s32.totalorder %s23, 1
      %p83 = por %p81, %p82
      %p84 = scmp.ne.s32.totalorder %s73, %s74
      %p85 = scmp.eq.s32.totalorder %s23, 0
      %p86 = por %p84, %p85
      %p87 = scmp.ne.s32.totalorder %s73, %s74
      %p88 = scmp.eq.s32.totalorder %s24, 1
      %p89 = por %p87, %p88
      %p91 = scmp.ne.s32.totalorder %s74, %s90
      %p92 = scmp.eq.s32.totalorder %s24, 0
      %p93 = por %p91, %p92
      %s94 = ssub.s32 %s25, %s37
      %s95 = ssub.s32 %s26, %s33
      %s96 = sor.u32 %s94, %s95
      %p97 = scmp.eq.s32.totalorder %s96, 0
      %s99 = sadd.s32 %s98, 1
      %s100 = scalar_select %p97, %s98, %s99
      %p103 = pneg %p97
      %p104 = scmp.eq.s32.totalorder %s18, 1
      %p105 = por %p103, %p104
      %p106 = scmp.ne.s32.totalorder %s98, %s101
      %p107 = scmp.eq.s32.totalorder %s18, 0
      %p108 = por %p106, %p107
      %p109 = scmp.ne.s32.totalorder %s98, %s101
      %p110 = scmp.eq.s32.totalorder %s23, 1
      %p111 = por %p109, %p110
      %p112 = scmp.ne.s32.totalorder %s101, %s102
      %p113 = scmp.eq.s32.totalorder %s23, 0
      %p114 = por %p112, %p113
      %p115 = scmp.ne.s32.totalorder %s101, %s102
      %p116 = scmp.eq.s32.totalorder %s24, 1
      %p117 = por %p115, %p116
      %p119 = scmp.ne.s32.totalorder %s102, %s118
      %p120 = scmp.eq.s32.totalorder %s24, 0
      %p121 = por %p119, %p120
      %s122 = ssub.s32 %s25, %s37
      %p123 = scmp.eq.s32.totalorder %s122, 0
      %s125 = sadd.s32 %s124, 1
      %s126 = scalar_select %p123, %s124, %s125
      %p129 = pneg %p123
      %p130 = scmp.eq.s32.totalorder %s18, 1
      %p131 = por %p129, %p130
      %p132 = scmp.ne.s32.totalorder %s124, %s127
      %p133 = scmp.eq.s32.totalorder %s18, 0
      %p134 = por %p132, %p133
      %p135 = scmp.ne.s32.totalorder %s124, %s127
      %p136 = scmp.eq.s32.totalorder %s23, 1
      %p137 = por %p135, %p136
      %p138 = scmp.ne.s32.totalorder %s127, %s128
      %p139 = scmp.eq.s32.totalorder %s23, 0
      %p140 = por %p138, %p139
      %p141 = scmp.ne.s32.totalorder %s127, %s128
      %p142 = scmp.eq.s32.totalorder %s24, 1
      %p143 = por %p141, %p142
      %p145 = scmp.ne.s32.totalorder %s128, %s144
      %p146 = scmp.eq.s32.totalorder %s24, 0
      %p147 = por %p145, %p146
      %p148 = scmp.le.s32.totalorder 1, %s18
      %p149 = scmp.lt.s32.totalorder %s18, 3
      %p150 = pnand %p148, %p149
      %p151 = pneg %p150
      // Predicated region
      $region9: #{tpu_custom_call.1} parent=5 // pred_check
        _
      $region10: #{tpu_custom_call.1} parent=5 // pred_check_branch
        %153 = sbr.rel (%p150) target = $region12
      $region11: #{tpu_custom_call.1} parent=5 // pred_region
        %s154 = ssub.s32 %s18, 1
      $region12: #{tpu_custom_call.1} parent=5 // pred_fallthru
        _
      %p155 = scmp.lt.s32.totalorder %s18, 2
      // Predicated region
      $region13: #{tpu_custom_call.1} parent=5 // pred_check
        %p156 = pneg %p155
      $region14: #{tpu_custom_call.1} parent=5 // pred_check_branch
        %158 = sbr.rel (%p156) target = $region16
      $region15: #{tpu_custom_call.1} parent=5 // pred_region
        // Predicated region
        $region17: #{tpu_custom_call.1} parent=15 // pred_check
          %p159 = pneg %p52
        $region18: #{tpu_custom_call.1} parent=15 // pred_check_branch
          %161 = sbr.rel (%p159) target = $region20
        $region19: #{tpu_custom_call.1} parent=15 // pred_region
          %s162 = sand.u32 %s42, 1
          %s163 = scalar_lea.sflag [#allocation4], %s162
          %s164 = sand.u32 %s42, 1
          %s165 = smul.addr %s164, 48
          %s166 = scalar_lea.vmem [#allocation3], %s165
          %s167 = smul.u32 2, %s26
          %s169 = ssub.s32 768, 768
          %170 = vsyncadd %s163, %s169
          %s171 = smul.addr %s25, 6
          %s172 = sadd.s32 %s167, %s171
          %s173 = smul.addr %s172, 128
          %s174 = scalar_lea.hbm %s0, %s173
          %s175 = sshll.u32 %s166, 4
          %s176 = int_to_ptr.vmem [resolvable:$true] %s175
          %181 = dma.hbm_to_vmem [thread:$0]  %s174, 768, %s176, %s163, 128, 128, 8
        $region20: #{tpu_custom_call.1} parent=15 // pred_fallthru
          _
        // Predicated region
        $region21: #{tpu_custom_call.1} parent=15 // pred_check
          %p182 = pneg %p80
        $region22: #{tpu_custom_call.1} parent=15 // pred_check_branch
          %184 = sbr.rel (%p182) target = $region24
        $region23: #{tpu_custom_call.1} parent=15 // pred_region
          %s185 = sand.u32 %s18, 1
          %s186 = scalar_lea.sflag [#allocation7], %s185
          %s187 = sand.u32 %s70, 1
          %s188 = smul.addr %s187, 48
          %s189 = scalar_lea.vmem [#allocation6], %s188
          %s190 = smul.u32 2, %s26
          %s192 = ssub.s32 768, 768
          %193 = vsyncadd %s186, %s192
          %s194 = smul.addr %s25, 6
          %s195 = sadd.s32 %s190, %s194
          %s196 = smul.addr %s195, 128
          %s197 = scalar_lea.hbm %s1, %s196
          %s198 = sshll.u32 %s189, 4
          %s199 = int_to_ptr.vmem [resolvable:$true] %s198
          %204 = dma.hbm_to_vmem [thread:$0]  %s197, 768, %s199, %s186, 128, 128, 8
        $region24: #{tpu_custom_call.1} parent=15 // pred_fallthru
          _
        // Predicated region
        $region25: #{tpu_custom_call.1} parent=15 // pred_check
          %p205 = pneg %p108
        $region26: #{tpu_custom_call.1} parent=15 // pred_check_branch
          %207 = sbr.rel (%p205) target = $region28
        $region27: #{tpu_custom_call.1} parent=15 // pred_region
          %s208 = sand.u32 %s18, 1
          %s209 = scalar_lea.sflag [#allocation7], %s208
          %s210 = sand.u32 %s98, 1
          %s211 = smul.addr %s210, 48
          %s212 = scalar_lea.vmem [#allocation8], %s211
          %s213 = smul.u32 2, %s26
          %s215 = ssub.s32 768, 768
          %216 = vsyncadd %s209, %s215
          %s217 = smul.addr %s25, 6
          %s218 = sadd.s32 %s213, %s217
          %s219 = smul.addr %s218, 128
          %s220 = scalar_lea.hbm %s2, %s219
          %s221 = sshll.u32 %s212, 4
          %s222 = int_to_ptr.vmem [resolvable:$true] %s221
          %227 = dma.hbm_to_vmem [thread:$0]  %s220, 768, %s222, %s209, 128, 128, 8
        $region28: #{tpu_custom_call.1} parent=15 // pred_fallthru
          _
      $region16: #{tpu_custom_call.1} parent=5 // pred_fallthru
        _
      %p228 = scmp.le.s32.totalorder 1, %s18
      %p229 = scmp.lt.s32.totalorder %s18, 3
      %p230 = pnand %p228, %p229
      %p231 = pneg %p230
      // Predicated region
      $region29: #{tpu_custom_call.1} parent=5 // pred_check
        _
      $region30: #{tpu_custom_call.1} parent=5 // pred_check_branch
        %233 = sbr.rel (%p230) target = $region32
      $region31: #{tpu_custom_call.1} parent=5 // pred_region
        %s234 = ssub.s32 %s18, 1
        %s235 = sand.u32 %s45, 1
        %s236 = scalar_lea.sflag [#allocation4], %s235
        %s237 = sand.u32 %s45, 1
        %s238 = smul.addr %s237, 48
        %s239 = scalar_lea.vmem [#allocation3], %s238
        // Predicated region
        $region33: #{tpu_custom_call.1} parent=31 // pred_check
          %p240 = pneg %p58
        $region34: #{tpu_custom_call.1} parent=31 // pred_check_branch
          %242 = sbr.rel (%p240) target = $region36
        $region35: #{tpu_custom_call.1} parent=31 // pred_region
          %243 = dma.done %s236, 768
        $region36: #{tpu_custom_call.1} parent=31 // pred_fallthru
          _
        %s244 = sand.u32 %s23, 1
        %s245 = scalar_lea.sflag [#allocation7], %s244
        %s246 = sand.u32 %s73, 1
        %s247 = smul.addr %s246, 48
        %s248 = scalar_lea.vmem [#allocation6], %s247
        // Predicated region
        $region37: #{tpu_custom_call.1} parent=31 // pred_check
          %p249 = pneg %p86
        $region38: #{tpu_custom_call.1} parent=31 // pred_check_branch
          %251 = sbr.rel (%p249) target = $region40
        $region39: #{tpu_custom_call.1} parent=31 // pred_region
          %252 = dma.done %s245, 768
        $region40: #{tpu_custom_call.1} parent=31 // pred_fallthru
          _
        %s253 = sand.u32 %s23, 1
        %s254 = scalar_lea.sflag [#allocation7], %s253
        %s255 = sand.u32 %s101, 1
        %s256 = smul.addr %s255, 48
        %s257 = scalar_lea.vmem [#allocation8], %s256
        // Predicated region
        $region41: #{tpu_custom_call.1} parent=31 // pred_check
          %p258 = pneg %p114
        $region42: #{tpu_custom_call.1} parent=31 // pred_check_branch
          %260 = sbr.rel (%p258) target = $region44
        $region43: #{tpu_custom_call.1} parent=31 // pred_region
          %261 = dma.done %s254, 768
        $region44: #{tpu_custom_call.1} parent=31 // pred_fallthru
          _
        %s262 = sand.u32 %s45, 1
        %s263 = scalar_lea.sflag [#allocation4], %s262
        %s264 = sand.u32 %s45, 1
        %s265 = smul.addr %s264, 48
        %s266 = scalar_lea.vmem [#allocation3], %s265
        %p267 = pneg %p58
        %p268 = pneg %p55
        %s269 = sand.u32 %s23, 1
        %s270 = scalar_lea.sflag [#allocation7], %s269
        %s271 = sand.u32 %s73, 1
        %s272 = smul.addr %s271, 48
        %s273 = scalar_lea.vmem [#allocation6], %s272
        %p274 = pneg %p86
        %p275 = pneg %p83
        %s276 = sand.u32 %s23, 1
        %s277 = scalar_lea.sflag [#allocation7], %s276
        %s278 = sand.u32 %s101, 1
        %s279 = smul.addr %s278, 48
        %s280 = scalar_lea.vmem [#allocation8], %s279
        %p281 = pneg %p114
        %p282 = pneg %p111
        %p283 = pneg %p140
        %p284 = pneg %p137
        %s285 = sand.u32 %s127, 1
        %s286 = scalar_lea.sflag [#allocation5], %s285
        %s287 = sand.u32 %s127, 1
        %s288 = smul.addr %s287, 8
        %s289 = scalar_lea.vmem [#allocation9], %s288
        %s290 = smul.u32 2, %s28
        %s291 = smul.u32 2, %s28
        %s292 = smul.u32 2, %s28
        %p293 = scmp.eq.s32.totalorder %s28, 0
        %v294 = vld [vmem:[%s239] sm:$0xff]
        %v295 = vld [vmem:[%s239 + $0x8] sm:$0xff]
        %v296 = vld [vmem:[%s239 + $0x10] sm:$0xff]
        %v297 = vld [vmem:[%s239 + $0x18] sm:$0xff]
        %v298 = vld [vmem:[%s239 + $0x20] sm:$0xff]
        %v299 = vld [vmem:[%s239 + $0x28] sm:$0xff]
        %v300 = vld [vmem:[%s248] sm:$0xff]
        %v301 = vld [vmem:[%s248 + $0x8] sm:$0xff]
        %v302 = vld [vmem:[%s248 + $0x10] sm:$0xff]
        %v303 = vld [vmem:[%s248 + $0x18] sm:$0xff]
        %v304 = vld [vmem:[%s248 + $0x20] sm:$0xff]
        %v305 = vld [vmem:[%s248 + $0x28] sm:$0xff]
        %v306 = vld [vmem:[%s257] sm:$0xff]
        %v307 = vld [vmem:[%s257 + $0x8] sm:$0xff]
        %v308 = vld [vmem:[%s257 + $0x10] sm:$0xff]
        %v309 = vld [vmem:[%s257 + $0x18] sm:$0xff]
        %v310 = vld [vmem:[%s257 + $0x20] sm:$0xff]
        %v311 = vld [vmem:[%s257 + $0x28] sm:$0xff]
        %v312 = vlaneseq
        %v313 = vand.u32 %v312, 127
        %vm314 = vcmp.eq.s32.totalorder %v313, 0
        %vm315 = vcmp.eq.s32.totalorder %v313, 127
        %v316 = vlaneseq
        %v317 = vshrl.u32 %v316, 7
        %v318 = vadd.s32 %v317, 8
        %vm319 = vcmp.eq.s32.totalorder %v317, 0
        %vm320 = vcmp.eq.s32.totalorder %v318, 0
        %v321 = vsub.f32 %v294, %v306
        %v322 = vsub.f32 %v295, %v307
        %v323 = vsub.f32 %v296, %v308
        %v324 = vsub.f32 %v297, %v309
        %v325 = vsub.f32 %v298, %v310
        %v326 = vsub.f32 %v299, %v311
        %v327 = vand.u32 2147483647, %v321
        %v328 = vand.u32 2147483647, %v322
        %v329 = vand.u32 2147483647, %v323
        %v330 = vand.u32 2147483647, %v324
        %v331 = vand.u32 2147483647, %v325
        %v332 = vand.u32 2147483647, %v326
        %v333 = vadd.f32 %v327, %v329
        %v334 = vadd.f32 %v328, %v330
        %v335 = vadd.f32 %v333, %v331
        %v336 = vadd.f32 %v334, %v332
        %v337 = vadd.f32 %v335, %v336
        %v338 = vrot.slane %v337, 4
        %v339 = vadd.f32 %v337, %v338
        %v340 = vrot.slane %v339, 2
        %v341 = vadd.f32 %v339, %v340
        %v342 = vrot.slane %v341, 1
        %v343 = vadd.f32 %v341, %v342
        %v344 = vsub.f32 %v300, %v306
        %v345 = vsub.f32 %v301, %v307
        %v346 = vsub.f32 %v302, %v308
        %v347 = vsub.f32 %v303, %v309
        %v348 = vsub.f32 %v304, %v310
        %v349 = vsub.f32 %v305, %v311
        %v350 = vmul.f32 %v344, -0.168736
        %v351 = vmul.f32 %v345, -0.168736
        %v352 = vmul.f32 %v346, -0.331264
        %v353 = vmul.f32 %v347, -0.331264
        %v354 = vadd.f32 %v350, %v352
        %v355 = vadd.f32 %v351, %v353
        %v356 = vmul.f32 %v348, 0.5
        %v357 = vmul.f32 %v349, 0.5
        %v358 = vadd.f32 %v354, %v356
        %v359 = vadd.f32 %v355, %v357
        %v360 = vmul.f32 %v344, 0.5
        %v361 = vmul.f32 %v345, 0.5
        %v362 = vmul.f32 %v346, -0.418688
        %v363 = vmul.f32 %v347, -0.418688
        %v364 = vadd.f32 %v360, %v362
        %v365 = vadd.f32 %v361, %v363
        %v366 = vmul.f32 %v348, -0.081312
        %v367 = vmul.f32 %v349, -0.081312
        %v368 = vadd.f32 %v364, %v366
        %v369 = vadd.f32 %v365, %v367
        %v370 = vand.u32 2147483647, %v358
        %v371 = vand.u32 2147483647, %v359
        %v372 = vadd.f32 %v370, %v371
        %v373 = vrot.slane %v372, 4
        %v374 = vadd.f32 %v372, %v373
        %v375 = vrot.slane %v374, 2
        %v376 = vadd.f32 %v374, %v375
        %v377 = vrot.slane %v376, 1
        %v378 = vadd.f32 %v376, %v377
        %v379 = vand.u32 2147483647, %v368
        %v380 = vand.u32 2147483647, %v369
        %v381 = vadd.f32 %v379, %v380
        %v382 = vrot.slane %v381, 4
        %v383 = vadd.f32 %v381, %v382
        %v384 = vrot.slane %v383, 2
        %v385 = vadd.f32 %v383, %v384
        %v386 = vrot.slane %v385, 1
        %v387 = vadd.f32 %v385, %v386
        %v388 = vmul.f32 %v300, 0.299
        %v389 = vmul.f32 %v301, 0.299
        %v390 = vmul.f32 %v302, 0.587
        %v391 = vmul.f32 %v303, 0.587
        %v392 = vadd.f32 %v388, %v390
        %v393 = vadd.f32 %v389, %v391
        %v394 = vmul.f32 %v304, 0.114
        %v395 = vmul.f32 %v305, 0.114
        %v396 = vadd.f32 %v392, %v394
        %v397 = vadd.f32 %v393, %v395
        %v398 = vmul.f32 %v294, 0.299
        %v399 = vmul.f32 %v295, 0.299
        %v400 = vmul.f32 %v296, 0.587
        %v401 = vmul.f32 %v297, 0.587
        %v402 = vadd.f32 %v398, %v400
        %v403 = vadd.f32 %v399, %v401
        %v404 = vmul.f32 %v298, 0.114
        %v405 = vmul.f32 %v299, 0.114
        %v406 = vadd.f32 %v402, %v404
        %v407 = vadd.f32 %v403, %v405
        %v408 = vmul.f32 %v306, 0.299
        %v409 = vmul.f32 %v307, 0.299
        %v410 = vmul.f32 %v308, 0.587
        %v411 = vmul.f32 %v309, 0.587
        %v412 = vadd.f32 %v408, %v410
        %v413 = vadd.f32 %v409, %v411
        %v414 = vmul.f32 %v310, 0.114
        %v415 = vmul.f32 %v311, 0.114
        %v416 = vadd.f32 %v412, %v414
        %v417 = vadd.f32 %v413, %v415
        %v418 = vld [vmem:[#allocation2] sm:$0x1]
        %s419 = scalar_select %p293, 1, 0
        %v420 = vstv %s419
        %vm421 = vcmp.eq.s32.totalorder %v420, 1
        %v422 = vsel %vm421, %v396, %v418
        %v423 = vld [vmem:[#allocation2 + $0x1] sm:$0x1]
        %v424 = vsel %vm421, %v396, %v423
        %v425 = vrot.slane %v396, 7
        %v426 = vrot.slane %v397, 7
        %vm427 = vcmp.lt.s32.totalorder %v317, 1
        %v428 = vsel %vm427, %v425, %v426
        %v429 = vsel %vm427, %v426, %v425
        %v430 = vlaneseq
        %v431 = vshrl.u32 %v430, 7
        %v432 = vsub.s32 0, %v431
        %v433 = vrot.slane %v424, %v432
        %v434 = vsel %vm319, %v433, %v429
        %v435 = vsel %vm320, %v433, %v428
        %v436 = vrot.slane %v434, 7
        %v437 = vrot.slane %v435, 7
        %v438 = vsel %vm427, %v436, %v437
        %v439 = vsel %vm427, %v437, %v436
        %v440 = vlaneseq
        %v441 = vshrl.u32 %v440, 7
        %v442 = vsub.s32 0, %v441
        %v443 = vrot.slane %v422, %v442
        %v444 = vsel %vm319, %v443, %v439
        %v445 = vsel %vm320, %v443, %v438
        %v446 = vmul.f32 %v434, 2.0
        %v447 = vmul.f32 %v435, 2.0
        %v448 = vadd.f32 %v444, %v446
        %v449 = vadd.f32 %v445, %v447
        %v450 = vadd.f32 %v448, %v396
        %v451 = vadd.f32 %v449, %v397
        %v452 = vsub.f32 %v396, %v444
        %v453 = vsub.f32 %v397, %v445
        %454 = vrot.lane.b32.xlu0 %v450, 127
        %v455 = vpop.permute.xlu0 %454
        %456 = vrot.lane.b32.xlu0 %v451, 127
        %v457 = vpop.permute.xlu0 %456
        %v458 = vsel %vm315, %v450, %v455
        %v459 = vsel %vm315, %v451, %v457
        %460 = vrot.lane.b32.xlu0 %v450, 1
        %v461 = vpop.permute.xlu0 %460
        %462 = vrot.lane.b32.xlu0 %v451, 1
        %v463 = vpop.permute.xlu0 %462
        %v464 = vsel %vm314, %v450, %v461
        %v465 = vsel %vm314, %v451, %v463
        %v466 = vsub.f32 %v458, %v464
        %v467 = vsub.f32 %v459, %v465
        %v468 = vand.u32 2147483647, %v466
        %v469 = vand.u32 2147483647, %v467
        %470 = vrot.lane.b32.xlu0 %v452, 1
        %v471 = vpop.permute.xlu0 %470
        %472 = vrot.lane.b32.xlu0 %v453, 1
        %v473 = vpop.permute.xlu0 %472
        %v474 = vsel %vm314, %v452, %v471
        %v475 = vsel %vm314, %v453, %v473
        %v476 = vmul.f32 %v452, 2.0
        %v477 = vmul.f32 %v453, 2.0
        %v478 = vadd.f32 %v474, %v476
        %v479 = vadd.f32 %v475, %v477
        %480 = vrot.lane.b32.xlu0 %v452, 127
        %v481 = vpop.permute.xlu0 %480
        %482 = vrot.lane.b32.xlu0 %v453, 127
        %v483 = vpop.permute.xlu0 %482
        %v484 = vsel %vm315, %v452, %v481
        %v485 = vsel %vm315, %v453, %v483
        %v486 = vadd.f32 %v478, %v484
        %v487 = vadd.f32 %v479, %v485
        %v488 = vand.u32 2147483647, %v486
        %v489 = vand.u32 2147483647, %v487
        %v490 = vld [vmem:[#allocation2 + $0x2] sm:$0x1]
        %v491 = vsel %vm421, %v406, %v490
        %v492 = vld [vmem:[#allocation2 + $0x3] sm:$0x1]
        %v493 = vsel %vm421, %v406, %v492
        %v494 = vrot.slane %v406, 7
        %v495 = vrot.slane %v407, 7
        %v496 = vsel %vm427, %v494, %v495
        %v497 = vsel %vm427, %v495, %v494
        %v498 = vlaneseq
        %v499 = vshrl.u32 %v498, 7
        %v500 = vsub.s32 0, %v499
        %v501 = vrot.slane %v493, %v500
        %v502 = vsel %vm319, %v501, %v497
        %v503 = vsel %vm320, %v501, %v496
        %v504 = vrot.slane %v502, 7
        %v505 = vrot.slane %v503, 7
        %v506 = vsel %vm427, %v504, %v505
        %v507 = vsel %vm427, %v505, %v504
        %v508 = vlaneseq
        %v509 = vshrl.u32 %v508, 7
        %v510 = vsub.s32 0, %v509
        %v511 = vrot.slane %v491, %v510
        %v512 = vsel %vm319, %v511, %v507
        %v513 = vsel %vm320, %v511, %v506
        %v514 = vmul.f32 %v502, 2.0
        %v515 = vmul.f32 %v503, 2.0
        %v516 = vadd.f32 %v512, %v514
        %v517 = vadd.f32 %v513, %v515
        %v518 = vadd.f32 %v516, %v406
        %v519 = vadd.f32 %v517, %v407
        %v520 = vsub.f32 %v406, %v512
        %v521 = vsub.f32 %v407, %v513
        %522 = vrot.lane.b32.xlu0 %v518, 127
        %v523 = vpop.permute.xlu0 %522
        %524 = vrot.lane.b32.xlu0 %v519, 127
        %v525 = vpop.permute.xlu0 %524
        %v526 = vsel %vm315, %v518, %v523
        %v527 = vsel %vm315, %v519, %v525
        %528 = vrot.lane.b32.xlu0 %v518, 1
        %v529 = vpop.permute.xlu0 %528
        %530 = vrot.lane.b32.xlu0 %v519, 1
        %v531 = vpop.permute.xlu0 %530
        %v532 = vsel %vm314, %v518, %v529
        %v533 = vsel %vm314, %v519, %v531
        %v534 = vsub.f32 %v526, %v532
        %v535 = vsub.f32 %v527, %v533
        %v536 = vand.u32 2147483647, %v534
        %v537 = vand.u32 2147483647, %v535
        %538 = vrot.lane.b32.xlu0 %v520, 1
        %v539 = vpop.permute.xlu0 %538
        %540 = vrot.lane.b32.xlu0 %v521, 1
        %v541 = vpop.permute.xlu0 %540
        %v542 = vsel %vm314, %v520, %v539
        %v543 = vsel %vm314, %v521, %v541
        %v544 = vmul.f32 %v520, 2.0
        %v545 = vmul.f32 %v521, 2.0
        %v546 = vadd.f32 %v542, %v544
        %v547 = vadd.f32 %v543, %v545
        %548 = vrot.lane.b32.xlu0 %v520, 127
        %v549 = vpop.permute.xlu0 %548
        %550 = vrot.lane.b32.xlu0 %v521, 127
        %v551 = vpop.permute.xlu0 %550
        %v552 = vsel %vm315, %v520, %v549
        %v553 = vsel %vm315, %v521, %v551
        %v554 = vadd.f32 %v546, %v552
        %v555 = vadd.f32 %v547, %v553
        %v556 = vand.u32 2147483647, %v554
        %v557 = vand.u32 2147483647, %v555
        %v558 = vld [vmem:[#allocation2 + $0x4] sm:$0x1]
        %v559 = vsel %vm421, %v416, %v558
        %v560 = vld [vmem:[#allocation2 + $0x5] sm:$0x1]
        %v561 = vsel %vm421, %v416, %v560
        %v562 = vrot.slane %v416, 7
        %v563 = vrot.slane %v417, 7
        %v564 = vsel %vm427, %v562, %v563
        %v565 = vsel %vm427, %v563, %v562
        %v566 = vlaneseq
        %v567 = vshrl.u32 %v566, 7
        %v568 = vsub.s32 0, %v567
        %v569 = vrot.slane %v561, %v568
        %v570 = vsel %vm319, %v569, %v565
        %v571 = vsel %vm320, %v569, %v564
        %v572 = vrot.slane %v570, 7
        %v573 = vrot.slane %v571, 7
        %v574 = vsel %vm427, %v572, %v573
        %v575 = vsel %vm427, %v573, %v572
        %v576 = vlaneseq
        %v577 = vshrl.u32 %v576, 7
        %v578 = vsub.s32 0, %v577
        %v579 = vrot.slane %v559, %v578
        %v580 = vsel %vm319, %v579, %v575
        %v581 = vsel %vm320, %v579, %v574
        %v582 = vmul.f32 %v570, 2.0
        %v583 = vmul.f32 %v571, 2.0
        %v584 = vadd.f32 %v580, %v582
        %v585 = vadd.f32 %v581, %v583
        %v586 = vadd.f32 %v584, %v416
        %v587 = vadd.f32 %v585, %v417
        %v588 = vsub.f32 %v416, %v580
        %v589 = vsub.f32 %v417, %v581
        %590 = vrot.lane.b32.xlu0 %v586, 127
        %v591 = vpop.permute.xlu0 %590
        %592 = vrot.lane.b32.xlu0 %v587, 127
        %v593 = vpop.permute.xlu0 %592
        %v594 = vsel %vm315, %v586, %v591
        %v595 = vsel %vm315, %v587, %v593
        %596 = vrot.lane.b32.xlu0 %v586, 1
        %v597 = vpop.permute.xlu0 %596
        %598 = vrot.lane.b32.xlu0 %v587, 1
        %v599 = vpop.permute.xlu0 %598
        %v600 = vsel %vm314, %v586, %v597
        %v601 = vsel %vm314, %v587, %v599
        %v602 = vsub.f32 %v594, %v600
        %v603 = vsub.f32 %v595, %v601
        %v604 = vand.u32 2147483647, %v602
        %v605 = vand.u32 2147483647, %v603
        %606 = vrot.lane.b32.xlu0 %v588, 1
        %v607 = vpop.permute.xlu0 %606
        %608 = vrot.lane.b32.xlu0 %v589, 1
        %v609 = vpop.permute.xlu0 %608
        %v610 = vsel %vm314, %v588, %v607
        %v611 = vsel %vm314, %v589, %v609
        %v612 = vmul.f32 %v588, 2.0
        %v613 = vmul.f32 %v589, 2.0
        %v614 = vadd.f32 %v610, %v612
        %v615 = vadd.f32 %v611, %v613
        %616 = vrot.lane.b32.xlu0 %v588, 127
        %v617 = vpop.permute.xlu0 %616
        %618 = vrot.lane.b32.xlu0 %v589, 127
        %v619 = vpop.permute.xlu0 %618
        %v620 = vsel %vm315, %v588, %v617
        %v621 = vsel %vm315, %v589, %v619
        %v622 = vadd.f32 %v614, %v620
        %v623 = vadd.f32 %v615, %v621
        %v624 = vand.u32 2147483647, %v622
        %v625 = vand.u32 2147483647, %v623
        %v626 = vmax.f32 %v468, %v536
        %v627 = vmax.f32 %v469, %v537
        %v628 = vsub.f32 %v604, %v626
        %v629 = vsub.f32 %v605, %v627
        %v630 = vmax.f32 %v488, %v556
        %v631 = vmax.f32 %v489, %v557
        %v632 = vsub.f32 %v624, %v630
        %v633 = vsub.f32 %v625, %v631
        %v634 = vmul.f32 %v628, %v628
        %v635 = vmul.f32 %v629, %v629
        %v636 = vmul.f32 %v632, %v632
        %v637 = vmul.f32 %v633, %v633
        %v638 = vadd.f32 %v634, %v635
        %v639 = vrot.slane %v638, 4
        %v640 = vadd.f32 %v638, %v639
        %v641 = vrot.slane %v640, 2
        %v642 = vadd.f32 %v640, %v641
        %v643 = vrot.slane %v642, 1
        %v644 = vadd.f32 %v642, %v643
        %v645 = vsel %vm421, %v634, 0.0
        %v646 = vsub.f32 %v644, %v645
        %v647 = vadd.f32 %v636, %v637
        %v648 = vrot.slane %v647, 4
        %v649 = vadd.f32 %v647, %v648
        %v650 = vrot.slane %v649, 2
        %v651 = vadd.f32 %v649, %v650
        %v652 = vrot.slane %v651, 1
        %v653 = vadd.f32 %v651, %v652
        %v655 = vrot.slane %v646, 5
        %vm657 = vcmask 1040384
        %v658 = vsel %vm657, %v343, %v378
        %vm659 = vcmask 1041408
        %v660 = vsel %vm659, %v658, %v387
        %vm661 = vcmask 1042432
        %v662 = vsel %vm661, %v660, %v655
        %vm663 = vcmask 1043456
        %v664 = vsel %vm663, %v662, %v653
        %vm665 = vcmask 1044480
        %v666 = vsel %vm665, %v664, 0.0
        %v667 = vld [vmem:[%s289] sm:$0xff]
        %v668 = vadd.f32 %v667, %v666
        %v669 = vsel %vm421, %v666, %v668
        %670 = vst [vmem:[%s289] sm:$0xff] %v669
        // Predicated region
        $region45: #{tpu_custom_call.1} parent=31 // pred_check
          %p671 = pneg %p293
        $region46: #{tpu_custom_call.1} parent=31 // pred_check_branch
          %673 = sbr.rel (%p671) target = $region48
        $region47: #{tpu_custom_call.1} parent=31 // pred_region
          %v674 = vmul.f32 %v397, 3.0
          %v676 = vrot.slane %v674, 1
          %v678 = vadd.f32 %v397, %v676
          %v680 = vrot.slane %v397, 7
          %v682 = vsub.f32 %v397, %v680
          %684 = vrot.lane.b32.xlu0 %v678, 127
          %v685 = vpop.permute.xlu0 %684
          %vm687 = vcmask 1039360
          %v688 = vsel %vm687, %v685, %v678
          %689 = vrot.lane.b32.xlu0 %v678, 1
          %v690 = vpop.permute.xlu0 %689
          %vm692 = vcmask 7168
          %v693 = vsel %vm692, %v678, %v690
          %v694 = vsub.f32 %v688, %v693
          %v695 = vand.u32 2147483647, %v694
          %697 = vrot.lane.b32.xlu0 %v682, 1
          %v698 = vpop.permute.xlu0 %697
          %v700 = vsel %vm692, %v682, %v698
          %v701 = vmul.f32 %v682, 2.0
          %v702 = vadd.f32 %v700, %v701
          %703 = vrot.lane.b32.xlu0 %v682, 127
          %v704 = vpop.permute.xlu0 %703
          %v706 = vsel %vm687, %v704, %v682
          %v707 = vadd.f32 %v702, %v706
          %v708 = vand.u32 2147483647, %v707
          %v709 = vmul.f32 %v407, 3.0
          %v711 = vrot.slane %v709, 1
          %v713 = vadd.f32 %v407, %v711
          %v715 = vrot.slane %v407, 7
          %v717 = vsub.f32 %v407, %v715
          %719 = vrot.lane.b32.xlu0 %v713, 127
          %v720 = vpop.permute.xlu0 %719
          %v722 = vsel %vm687, %v720, %v713
          %723 = vrot.lane.b32.xlu0 %v713, 1
          %v724 = vpop.permute.xlu0 %723
          %v726 = vsel %vm692, %v713, %v724
          %v727 = vsub.f32 %v722, %v726
          %v728 = vand.u32 2147483647, %v727
          %730 = vrot.lane.b32.xlu0 %v717, 1
          %v731 = vpop.permute.xlu0 %730
          %v733 = vsel %vm692, %v717, %v731
          %v734 = vmul.f32 %v717, 2.0
          %v735 = vadd.f32 %v733, %v734
          %736 = vrot.lane.b32.xlu0 %v717, 127
          %v737 = vpop.permute.xlu0 %736
          %v739 = vsel %vm687, %v737, %v717
          %v740 = vadd.f32 %v735, %v739
          %v741 = vand.u32 2147483647, %v740
          %v742 = vmul.f32 %v417, 3.0
          %v744 = vrot.slane %v742, 1
          %v746 = vadd.f32 %v417, %v744
          %v748 = vrot.slane %v417, 7
          %v750 = vsub.f32 %v417, %v748
          %752 = vrot.lane.b32.xlu0 %v746, 127
          %v753 = vpop.permute.xlu0 %752
          %v755 = vsel %vm687, %v753, %v746
          %756 = vrot.lane.b32.xlu0 %v746, 1
          %v757 = vpop.permute.xlu0 %756
          %v759 = vsel %vm692, %v746, %v757
          %v760 = vsub.f32 %v755, %v759
          %v761 = vand.u32 2147483647, %v760
          %763 = vrot.lane.b32.xlu0 %v750, 1
          %v764 = vpop.permute.xlu0 %763
          %v766 = vsel %vm692, %v750, %v764
          %v767 = vmul.f32 %v750, 2.0
          %v768 = vadd.f32 %v766, %v767
          %769 = vrot.lane.b32.xlu0 %v750, 127
          %v770 = vpop.permute.xlu0 %769
          %v772 = vsel %vm687, %v770, %v750
          %v773 = vadd.f32 %v768, %v772
          %v774 = vand.u32 2147483647, %v773
          %v775 = vmax.f32 %v695, %v728
          %v776 = vsub.f32 %v761, %v775
          %v777 = vmax.f32 %v708, %v741
          %v778 = vsub.f32 %v774, %v777
          %v779 = vld [vmem:[%s289 + $0x3] sm:$0x3]
          %v780 = vmul.f32 %v776, %v776
          %v781 = vmul.f32 %v778, %v778
          %v783 = vrot.slane %v780, 6
          %v786 = vrot.slane %v781, 6
          %v788 = vsel %vm657, %v783, %v786
          %v789 = vadd.f32 %v779, %v788
          %790 = vst [vmem:[%s289 + $0x3] sm:$0x3] %v789
        $region48: #{tpu_custom_call.1} parent=31 // pred_fallthru
          _
        %v792 = vrot.slane %v397, 6
        %v795 = vrot.slane %v407, 4
        %v798 = vrot.slane %v417, 2
        %v800 = vsel %vm659, %v792, %v795
        %v801 = vsel %vm663, %v800, %v798
        %vm802 = vcmask 1045504
        %v803 = vsel %vm802, %v801, 0.0
        %804 = vst [vmem:[#allocation2] sm:$0xff] %v803
        %s805 = sand.u32 %s127, 1
        %s806 = scalar_lea.sflag [#allocation5], %s805
        %s807 = sand.u32 %s127, 1
        %s808 = smul.addr %s807, 8
        %s809 = scalar_lea.vmem [#allocation9], %s808
        // Predicated region
        $region49: #{tpu_custom_call.1} parent=31 // pred_check
          %p810 = pneg %p137
        $region50: #{tpu_custom_call.1} parent=31 // pred_check_branch
          %812 = sbr.rel (%p810) target = $region52
        $region51: #{tpu_custom_call.1} parent=31 // pred_region
          %s814 = ssub.s32 128, 128
          %815 = vsyncadd %s806, %s814
          %s816 = smul.addr %s27, 128
          %s817 = scalar_lea.hbm %s3, %s816
          %s819 = sshll.u32 %s809, 4
          %s820 = int_to_ptr.vmem [resolvable:$true] %s819
          %822 = dma.vmem_to_hbm [thread:$0]  %s820, 128, %s817, %s806
        $region52: #{tpu_custom_call.1} parent=31 // pred_fallthru
          _
      $region32: #{tpu_custom_call.1} parent=5 // pred_fallthru
        _
      %p823 = scmp.le.s32.totalorder 2, %s18
      // Predicated region
      $region53: #{tpu_custom_call.1} parent=5 // pred_check
        %p824 = pneg %p823
      $region54: #{tpu_custom_call.1} parent=5 // pred_check_branch
        %826 = sbr.rel (%p824) target = $region56
      $region55: #{tpu_custom_call.1} parent=5 // pred_region
        %s827 = ssub.s32 %s18, 2
        // Predicated region
        $region57: #{tpu_custom_call.1} parent=55 // pred_check
          %p828 = pneg %p143
        $region58: #{tpu_custom_call.1} parent=55 // pred_check_branch
          %830 = sbr.rel (%p828) target = $region60
        $region59: #{tpu_custom_call.1} parent=55 // pred_region
          %s831 = sand.u32 %s128, 1
          %s832 = scalar_lea.sflag [#allocation5], %s831
          %s833 = sand.u32 %s128, 1
          %s834 = smul.addr %s833, 8
          %s835 = scalar_lea.vmem [#allocation9], %s834
          %836 = dma.done %s832, 128
        $region60: #{tpu_custom_call.1} parent=55 // pred_fallthru
          _
      $region56: #{tpu_custom_call.1} parent=5 // pred_fallthru
        _
    $region6: #{tpu_custom_call.1} parent=1 // loop_footer
      %s22 = sadd.s32 1, %s18
    $region7: #{tpu_custom_call.1} parent=1 // loop_footer_branch
      %17 = sbr.rel target = $region3
    $region8: #{tpu_custom_call.1} parent=1 // loop_exit
      _
    %837 = vsyncpa [#allocation4], 1
    %s838 = scalar_lea.sflag [#allocation4], 1
    %839 = vsyncpa %s838, 1
    %840 = vsyncpa [#allocation7], 1
    %s841 = scalar_lea.sflag [#allocation7], 1
    %842 = vsyncpa %s841, 1
    %843 = vsyncpa [#allocation5], 1
    %s844 = scalar_lea.sflag [#allocation5], 1
    %845 = vsyncpa %s844, 1

</llo_original>
